<compile_context>
chip_gen: v5e
topology: v5e:2x2
jax: 0.10.0
libtpu: 0.0.40
codegen_flags: <defaults>
</compile_context>

<pallas_src>
import functools

import jax
import jax.numpy as jnp
from jax.experimental import pallas as pl
from jax.experimental.pallas import tpu as pltpu


_MASK_VALUE = -0.7 * float(jnp.finfo(jnp.float32).max)  # additive key-padding bias
_VMEM_LIMIT = 48 * 1024 * 1024                          # headroom under v7x's 64 MiB


def _pick_tile(size, target, align):
    """Largest multiple of `align` that divides `size` and is <= `target`.

    Falls back to the full dimension, which is always a legal BlockSpec block.
    """
    if size <= target or size % align != 0:
        return size
    t = min(target, size)
    t -= t % align
    while t >= align:
        if size % t == 0:
            return t
        t -= align
    return size


# ----------------------------- kernels --------------------------------------

def _matmul_kernel(x_ref, w_ref, o_ref, acc_ref):
    @pl.when(pl.program_id(2) == 0)
    def _():
        acc_ref[...] = jnp.zeros_like(acc_ref)

    acc_ref[...] += jnp.dot(x_ref[...], w_ref[...],
                            preferred_element_type=jnp.float32)

    @pl.when(pl.program_id(2) == pl.num_programs(2) - 1)
    def _():
        o_ref[...] = acc_ref[...].astype(o_ref.dtype)


def _flash_attn_kernel(q_ref, k_ref, v_ref, bias_ref, o_ref,
                       m_sc, l_sc, acc_sc, *, causal, tq, tk):
    qi = pl.program_id(1)
    ki = pl.program_id(2)

    @pl.when(ki == 0)
    def _init():
        m_sc[...] = jnp.full_like(m_sc, -jnp.inf)
        l_sc[...] = jnp.zeros_like(l_sc)
        acc_sc[...] = jnp.zeros_like(acc_sc)

    def _compute():
        q = q_ref[0]                       # (h, tq, d)  (already scaled via weights)
        k = k_ref[0]                       # (h, tk, d)
        v = v_ref[0]                       # (h, tk, d)

        # Batched q @ k^T on the MXU (no explicit transpose).
        s = jnp.einsum('hqd,hkd->hqk', q, k,
                       preferred_element_type=jnp.float32)    # (h, tq, tk)
        s = s + bias_ref[0]                # (1, tk) additive key-padding bias

        if causal:
            q_pos = qi * tq + jax.lax.broadcasted_iota(jnp.int32, (tq, tk), 0)
            k_pos = ki * tk + jax.lax.broadcasted_iota(jnp.int32, (tq, tk), 1)
            s = jnp.where((k_pos > q_pos)[None, :, :], _MASK_VALUE, s)

        # online softmax (f32), matches softmax(dim=-1, dtype=float32)
        m_prev = m_sc[...]
        m_new = jnp.maximum(m_prev, jnp.max(s, axis=-1, keepdims=True))
        alpha = jnp.exp(m_prev - m_new)                      # EUP
        p = jnp.exp(s - m_new)                               # EUP
        l_sc[...] = alpha * l_sc[...] + jnp.sum(p, axis=-1, keepdims=True)
        acc_sc[...] = alpha * acc_sc[...] + jnp.einsum(
            'hqk,hkd->hqd', p.astype(v.dtype), v,
            preferred_element_type=jnp.float32)
        m_sc[...] = m_new

    if causal:
        # Skip kv tiles that lie entirely above the diagonal (ki==0 never skipped).
        pl.when(ki * tk <= qi * tq + (tq - 1))(_compute)
    else:
        _compute()

    @pl.when(ki == pl.num_programs(2) - 1)
    def _finalize():
        l = l_sc[...]
        inv = pl.reciprocal(l, approx=True)      # EUP slot
        inv = inv * (2.0 - l * inv)              # one Newton step -> near-exact
        o_ref[0] = (acc_sc[...] * inv).astype(o_ref.dtype)


def _proj_ln_kernel(ao_ref, w_ref, g_ref, o_ref, acc_ref, *, eps):
    hi = pl.program_id(2)

    @pl.when(hi == 0)
    def _():
        acc_ref[...] = jnp.zeros_like(acc_ref)

    # per-head contribution of the output projection (reduction over heads)
    acc_ref[...] += jnp.dot(ao_ref[0, 0], w_ref[0],
                            preferred_element_type=jnp.float32)

    @pl.when(hi == pl.num_programs(2) - 1)
    def _():
        proj = acc_ref[...]
        mean = jnp.mean(proj, axis=-1, keepdims=True)
        var = jnp.mean((proj - mean) ** 2, axis=-1, keepdims=True)  # unbiased=False
        o_ref[0] = ((proj - mean) * jax.lax.rsqrt(var + eps)
                    * g_ref[...]).astype(o_ref.dtype)


# ----------------------------- pallas_call wrappers --------------------------

def _matmul(x2d, w_t):
    M, K = x2d.shape
    N = w_t.shape[1]
    tm = _pick_tile(M, 256, 8)
    tn = _pick_tile(N, 256, 128)
    tk = _pick_tile(K, 512, 128)
    return pl.pallas_call(
        _matmul_kernel,
        out_shape=jax.ShapeDtypeStruct((M, N), x2d.dtype),
        grid=(M // tm, N // tn, K // tk),
        in_specs=[
            pl.BlockSpec((tm, tk), lambda i, j, k: (i, k)),
            pl.BlockSpec((tk, tn), lambda i, j, k: (k, j)),
        ],
        out_specs=pl.BlockSpec((tm, tn), lambda i, j, k: (i, j)),
        scratch_shapes=[pltpu.VMEM((tm, tn), jnp.float32)],
        compiler_params=pltpu.CompilerParams(
            dimension_semantics=("parallel", "parallel", "arbitrary"),
            vmem_limit_bytes=_VMEM_LIMIT),
    )(x2d, w_t)


def _flash_attention(qkvT, bias, *, heads, dim_head, causal):
    # qkvT: (b, 3*heads, n, d) packed head-major; bias: (b, 1, n) f32 additive.
    b, _, n, d = qkvT.shape
    tq = _pick_tile(n, 256, 8)
    tk = _pick_tile(n, 256, 128)
    kernel = functools.partial(_flash_attn_kernel, causal=causal, tq=tq, tk=tk)
    qspec = pl.BlockSpec((1, heads, tq, d), lambda bi, qi, ki: (bi, 0, qi, 0))
    kspec = pl.BlockSpec((1, heads, tk, d), lambda bi, qi, ki: (bi, 1, ki, 0))
    vspec = pl.BlockSpec((1, heads, tk, d), lambda bi, qi, ki: (bi, 2, ki, 0))
    return pl.pallas_call(
        kernel,
        out_shape=jax.ShapeDtypeStruct((b, heads, n, d), qkvT.dtype),
        grid=(b, n // tq, n // tk),
        in_specs=[
            qspec, kspec, vspec,
            pl.BlockSpec((1, 1, tk), lambda bi, qi, ki: (bi, 0, ki)),
        ],
        out_specs=pl.BlockSpec((1, heads, tq, d), lambda bi, qi, ki: (bi, 0, qi, 0)),
        scratch_shapes=[
            pltpu.VMEM((heads, tq, 1), jnp.float32),   # running max
            pltpu.VMEM((heads, tq, 1), jnp.float32),   # running denom
            pltpu.VMEM((heads, tq, d), jnp.float32),   # output accumulator
        ],
        compiler_params=pltpu.CompilerParams(
            dimension_semantics=("parallel", "parallel", "arbitrary"),
            vmem_limit_bytes=_VMEM_LIMIT),
    )(qkvT, qkvT, qkvT, bias)


def _out_proj_ln(ao, w_out, g):
    # ao: (b, h, n, d) attention output; w_out: (dim, h*d); g: (dim,)
    b, h, n, d = ao.shape
    dim = w_out.shape[0]
    w3 = w_out.reshape(dim, h, d).transpose(1, 2, 0)   # (h, d, dim) per-head slices
    g2 = g.reshape(1, dim)
    tm = _pick_tile(n, 256, 8)
    eps = 1e-5 if ao.dtype == jnp.float32 else 1e-3
    kernel = functools.partial(_proj_ln_kernel, eps=eps)
    return pl.pallas_call(
        kernel,
        out_shape=jax.ShapeDtypeStruct((b, n, dim), ao.dtype),
        grid=(b, n // tm, h),
        in_specs=[
            pl.BlockSpec((1, 1, tm, d), lambda bi, ti, hi: (bi, hi, ti, 0)),
            pl.BlockSpec((1, d, dim), lambda bi, ti, hi: (hi, 0, 0)),
            pl.BlockSpec((1, dim), lambda bi, ti, hi: (0, 0)),
        ],
        out_specs=pl.BlockSpec((1, tm, dim), lambda bi, ti, hi: (bi, ti, 0)),
        scratch_shapes=[pltpu.VMEM((tm, dim), jnp.float32)],
        compiler_params=pltpu.CompilerParams(
            dimension_semantics=("parallel", "parallel", "arbitrary"),
            vmem_limit_bytes=_VMEM_LIMIT),
    )(ao, w3, g2)


# ----------------------------- glue (plain JAX) ------------------------------

def apply_rotary_pos_emb(freqs, t):
    rot_dim = freqs.shape[-1]
    t_rot, t_pass = t[..., :rot_dim], t[..., rot_dim:]
    x1, x2 = jnp.split(t_rot, 2, axis=-1)
    rotated = jnp.concatenate([-x2, x1], axis=-1)
    t_rot = t_rot * jnp.cos(freqs) + rotated * jnp.sin(freqs)
    return jnp.concatenate([t_rot, t_pass], axis=-1)


def attention_forward(x, params, *, heads, dim_head, causal=False,
                      mask=None, rotary_pos_emb=None):
    b, n, dim = x.shape
    inner = heads * dim_head
    scale = dim_head ** (-0.5)
    w_qkv, w_out, g = params["w_qkv"], params["w_out"], params["g"]

    # Fold q-scale into the q rows of the QKV weight (scale commutes with the
    # linear rotary map, so this equals `q = q * scale` applied before rotary).
    row_scale = jnp.where(jnp.arange(3 * inner) < inner, scale, 1.0)
    w_qkv_scaled = w_qkv * row_scale.astype(w_qkv.dtype)[:, None]

    # QKV projection: nn.Linear(x) == x @ W^T
    qkv = _matmul(x.reshape(b * n, dim), w_qkv_scaled.T)       # (b*n, 3*inner)
    qkv = qkv.reshape(b, n, 3 * heads, dim_head)

    if rotary_pos_emb is not None:
        # rotary applies to q, k and v alike in the PyTorch module
        qkv = apply_rotary_pos_emb(rotary_pos_emb[:, None, :], qkv)

    # single fused elementwise+transpose pass to head-major packed layout
    qkvT = qkv.transpose(0, 2, 1, 3)                           # (b, 3h, n, d)

    if mask is None:
        bias = jnp.zeros((b, 1, n), jnp.float32)
    else:
        bias = jnp.where(mask.reshape(b, 1, n), 0.0, _MASK_VALUE).astype(jnp.float32)

    ao = _flash_attention(qkvT, bias, heads=heads, dim_head=dim_head,
                          causal=causal)                       # (b, h, n, d)

    # fused out-projection (head reduction) + LayerNorm -> (b, n, dim)
    return _out_proj_ln(ao, w_out, g)


# ----------------------------- reference (pure JAX) --------------------------

def reference_forward(x, params, *, heads, dim_head, causal=False,
                      mask=None, rotary_pos_emb=None):
    b, n, dim = x.shape
    scale = dim_head ** (-0.5)
    w_qkv, w_out, g = params["w_qkv"], params["w_out"], params["g"]
    qkv = x @ w_qkv.T
    q, k, v = jnp.split(qkv, 3, axis=-1)
    to_heads = lambda t: t.reshape(b, n, heads, dim_head).transpose(0, 2, 1, 3)
    q, k, v = to_heads(q), to_heads(k), to_heads(v)
    q = q * scale
    if rotary_pos_emb is not None:
        q, k, v = (apply_rotary_pos_emb(rotary_pos_emb, t) for t in (q, k, v))
    sim = jnp.einsum("bhid,bhjd->bhij", q, k)
    mv = -jnp.finfo(sim.dtype).max
    if mask is not None:
        sim = jnp.where(mask[:, None, None, :], sim, mv)
    if causal:
        i, j = sim.shape[-2:]
        cm = jnp.triu(jnp.ones((i, j), bool), j - i + 1)
        sim = jnp.where(cm, mv, sim)
    attn = jax.nn.softmax(sim.astype(jnp.float32), axis=-1).astype(sim.dtype)
    out = jnp.einsum("bhij,bhjd->bhid", attn, v)
    out = out.transpose(0, 2, 1, 3).reshape(b, n, heads * dim_head)
    proj = out @ w_out.T
    mean = proj.mean(-1, keepdims=True)
    var = ((proj - mean) ** 2).mean(-1, keepdims=True)
    return (proj - mean) * jax.lax.rsqrt(var + 1e-5) * g


# ----------------------------- main ------------------------------------------

if __name__ == "__main__":
    b, n, dim = 2, 8, 32
    heads, dim_head = 2, 16
    inner = heads * dim_head
    rot_dim = 8  # even, <= dim_head

    key = jax.random.PRNGKey(0)
    k_x, k_qkv, k_out, k_rope = jax.random.split(key, 4)

    x = jax.random.normal(k_x, (b, n, dim), dtype=jnp.float32)
    params = {
        "w_qkv": jax.random.normal(k_qkv, (3 * inner, dim), jnp.float32) * 0.02,
        "w_out": jax.random.normal(k_out, (dim, inner), jnp.float32) * 0.02,
        "g": jnp.ones((dim,), jnp.float32),
    }
    mask = jnp.ones((b, n), dtype=bool).at[1, -2:].set(False)
    rotary_pos_emb = jax.random.normal(k_rope, (n, rot_dim), jnp.float32)

    # case 1: key-padding mask + rotary, non-causal
    fwd = jax.jit(functools.partial(attention_forward,
                                    heads=heads, dim_head=dim_head, causal=False))
    out = jax.block_until_ready(fwd(x, params, mask=mask,
                                    rotary_pos_emb=rotary_pos_emb))
    ref = reference_forward(x, params, heads=heads, dim_head=dim_head,
                            causal=False, mask=mask, rotary_pos_emb=rotary_pos_emb)
    assert out.shape == (b, n, dim)
    assert jnp.allclose(out, ref, atol=1e-4, rtol=1e-4), "mismatch (masked/rotary)"

    # case 2: causal, no mask / no rotary
    fwd_c = jax.jit(functools.partial(attention_forward,
                                      heads=heads, dim_head=dim_head, causal=True))
    out_c = jax.block_until_ready(fwd_c(x, params))
    ref_c = reference_forward(x, params, heads=heads, dim_head=dim_head, causal=True)
    assert jnp.allclose(out_c, ref_c, atol=1e-4, rtol=1e-4), "mismatch (causal)"

    print("KERNEL_OK")
</pallas_src>

<mosaic_0001>
module attributes {stable_mosaic.version = 11 : i64} {
  func.func @_matmul_kernel(%arg0: i32, %arg1: i32, %arg2: i32, %arg3: memref<16x32xf32, #tpu.memory_space<vmem>>, %arg4: memref<32x96xf32, #tpu.memory_space<vmem>>, %arg5: memref<16x96xf32, #tpu.memory_space<vmem>>, %arg6: memref<16x96xf32, #tpu.memory_space<vmem>>) attributes {dimension_semantics = [#tpu.dimension_semantics<parallel>, #tpu.dimension_semantics<parallel>, #tpu.dimension_semantics<arbitrary>], iteration_bounds = array<i64: 1, 1, 1>, scalar_prefetch = 0 : i64, scratch_operands = 1 : i64, tpu.core_type = #tpu.core_type<tc>, window_params = [{transform_indices = @transform_0, window_bounds = array<i64: 16, 32>}, {transform_indices = @transform_1, window_bounds = array<i64: 32, 96>}, {transform_indices = @transform_2, window_bounds = array<i64: 16, 96>}]} {
    %c0_i32 = arith.constant 0 : i32
    %0 = arith.cmpi eq, %arg2, %c0_i32 : i32
    %1 = arith.extui %0 : i1 to i32
    %c0_i32_0 = arith.constant 0 : i32
    %2 = arith.cmpi ne, %1, %c0_i32_0 : i32
    scf.if %2 {
      %cst_10 = arith.constant 0.000000e+00 : f32
      %12 = vector.broadcast %cst_10 : f32 to vector<16x96xf32>
      %c0_11 = arith.constant 0 : index
      %c0_12 = arith.constant 0 : index
      %13 = vector.load %arg6[%c0_11, %c0_12] : memref<16x96xf32, #tpu.memory_space<vmem>>, vector<16x96xf32>
      tpu.vector_store %arg6[%c0_11, %c0_12], %12 {strides = array<i32>} : memref<16x96xf32, #tpu.memory_space<vmem>>, vector<16x96xf32>,
    } else {
    }
    %c0 = arith.constant 0 : index
    %c0_1 = arith.constant 0 : index
    %3 = vector.load %arg6[%c0, %c0_1] : memref<16x96xf32, #tpu.memory_space<vmem>>, vector<16x96xf32>
    %c0_2 = arith.constant 0 : index
    %c0_3 = arith.constant 0 : index
    %4 = vector.load %arg3[%c0_2, %c0_3] : memref<16x32xf32, #tpu.memory_space<vmem>>, vector<16x32xf32>
    %c0_4 = arith.constant 0 : index
    %c0_5 = arith.constant 0 : index
    %5 = vector.load %arg4[%c0_4, %c0_5] : memref<32x96xf32, #tpu.memory_space<vmem>>, vector<32x96xf32>
    %cst = arith.constant dense<0.000000e+00> : vector<16x96xf32>
    %6 = tpu.matmul %4, %5, %cst {dimension_numbers = #tpu.dot_dimension_numbers<[1], [0], [0], [1], [0, 0, 1, 1], [], []>} : vector<16x32xf32>, vector<32x96xf32>, vector<16x96xf32> -> vector<16x96xf32>
    %7 = arith.addf %3, %6 : vector<16x96xf32>
    %c0_6 = arith.constant 0 : index
    %c0_7 = arith.constant 0 : index
    %8 = vector.load %arg6[%c0_6, %c0_7] : memref<16x96xf32, #tpu.memory_space<vmem>>, vector<16x96xf32>
    tpu.vector_store %arg6[%c0_6, %c0_7], %7 {strides = array<i32>} : memref<16x96xf32, #tpu.memory_space<vmem>>, vector<16x96xf32>,
    %c0_i32_8 = arith.constant 0 : i32
    %9 = arith.cmpi eq, %arg2, %c0_i32_8 : i32
    %10 = arith.extui %9 : i1 to i32
    %c0_i32_9 = arith.constant 0 : i32
    %11 = arith.cmpi ne, %10, %c0_i32_9 : i32
    scf.if %11 {
      %c0_10 = arith.constant 0 : index
      %c0_11 = arith.constant 0 : index
      %12 = vector.load %arg6[%c0_10, %c0_11] : memref<16x96xf32, #tpu.memory_space<vmem>>, vector<16x96xf32>
      %c0_12 = arith.constant 0 : index
      %c0_13 = arith.constant 0 : index
      %13 = vector.load %arg5[%c0_12, %c0_13] : memref<16x96xf32, #tpu.memory_space<vmem>>, vector<16x96xf32>
      tpu.vector_store %arg5[%c0_12, %c0_13], %12 {strides = array<i32>} : memref<16x96xf32, #tpu.memory_space<vmem>>, vector<16x96xf32>,
    } else {
    }
    return
  }
  func.func @transform_0(%arg0: i32, %arg1: i32, %arg2: i32) -> (i32, i32) {
    %c0_i32 = arith.constant 0 : i32
    return %arg0, %arg2 : i32, i32
  }
  func.func @transform_1(%arg0: i32, %arg1: i32, %arg2: i32) -> (i32, i32) {
    %c0_i32 = arith.constant 0 : i32
    return %arg2, %arg1 : i32, i32
  }
  func.func @transform_2(%arg0: i32, %arg1: i32, %arg2: i32) -> (i32, i32) {
    %c0_i32 = arith.constant 0 : i32
    return %arg0, %arg1 : i32, i32
  }
}

module attributes {stable_mosaic.version = 11 : i64} {
  func.func @_flash_attn_kernel(%arg0: i32, %arg1: i32, %arg2: i32, %arg3: memref<1x2x8x16xf32, #tpu.memory_space<vmem>>, %arg4: memref<1x2x8x16xf32, #tpu.memory_space<vmem>>, %arg5: memref<1x2x8x16xf32, #tpu.memory_space<vmem>>, %arg6: memref<1x1x8xf32, #tpu.memory_space<vmem>>, %arg7: memref<1x2x8x16xf32, #tpu.memory_space<vmem>>, %arg8: memref<2x8x1xf32, #tpu.memory_space<vmem>>, %arg9: memref<2x8x1xf32, #tpu.memory_space<vmem>>, %arg10: memref<2x8x16xf32, #tpu.memory_space<vmem>>) attributes {dimension_semantics = [#tpu.dimension_semantics<parallel>, #tpu.dimension_semantics<parallel>, #tpu.dimension_semantics<arbitrary>], iteration_bounds = array<i64: 2, 1, 1>, scalar_prefetch = 0 : i64, scratch_operands = 3 : i64, tpu.core_type = #tpu.core_type<tc>, window_params = [{transform_indices = @transform_0, window_bounds = array<i64: 1, 2, 8, 16>}, {transform_indices = @transform_1, window_bounds = array<i64: 1, 2, 8, 16>}, {transform_indices = @transform_2, window_bounds = array<i64: 1, 2, 8, 16>}, {transform_indices = @transform_3, window_bounds = array<i64: 1, 1, 8>}, {transform_indices = @transform_4, window_bounds = array<i64: 1, 2, 8, 16>}]} {
    %c0_i32 = arith.constant 0 : i32
    %0 = arith.cmpi eq, %arg2, %c0_i32 : i32
    %1 = arith.extui %0 : i1 to i32
    %c0_i32_0 = arith.constant 0 : i32
    %2 = arith.cmpi ne, %1, %c0_i32_0 : i32
    scf.if %2 {
      %cst_38 = arith.constant 0xFF800000 : f32
      %40 = vector.broadcast %cst_38 : f32 to vector<2x8x1xf32>
      %c0_39 = arith.constant 0 : index
      %c0_40 = arith.constant 0 : index
      %c0_41 = arith.constant 0 : index
      %41 = vector.load %arg8[%c0_39, %c0_40, %c0_41] : memref<2x8x1xf32, #tpu.memory_space<vmem>>, vector<2x8x1xf32>
      tpu.vector_store %arg8[%c0_39, %c0_40, %c0_41], %40 {strides = array<i32>} : memref<2x8x1xf32, #tpu.memory_space<vmem>>, vector<2x8x1xf32>,
      %cst_42 = arith.constant 0.000000e+00 : f32
      %42 = vector.broadcast %cst_42 : f32 to vector<2x8x1xf32>
      %c0_43 = arith.constant 0 : index
      %c0_44 = arith.constant 0 : index
      %c0_45 = arith.constant 0 : index
      %43 = vector.load %arg9[%c0_43, %c0_44, %c0_45] : memref<2x8x1xf32, #tpu.memory_space<vmem>>, vector<2x8x1xf32>
      tpu.vector_store %arg9[%c0_43, %c0_44, %c0_45], %42 {strides = array<i32>} : memref<2x8x1xf32, #tpu.memory_space<vmem>>, vector<2x8x1xf32>,
      %cst_46 = arith.constant 0.000000e+00 : f32
      %44 = vector.broadcast %cst_46 : f32 to vector<2x8x16xf32>
      %c0_47 = arith.constant 0 : index
      %c0_48 = arith.constant 0 : index
      %c0_49 = arith.constant 0 : index
      %45 = vector.load %arg10[%c0_47, %c0_48, %c0_49] : memref<2x8x16xf32, #tpu.memory_space<vmem>>, vector<2x8x16xf32>
      tpu.vector_store %arg10[%c0_47, %c0_48, %c0_49], %44 {strides = array<i32>} : memref<2x8x16xf32, #tpu.memory_space<vmem>>, vector<2x8x16xf32>,
    } else {
    }
    %c0 = arith.constant 0 : index
    %c0_1 = arith.constant 0 : index
    %c0_2 = arith.constant 0 : index
    %c0_3 = arith.constant 0 : index
    %3 = vector.load %arg3[%c0, %c0_1, %c0_2, %c0_3] : memref<1x2x8x16xf32, #tpu.memory_space<vmem>>, vector<1x2x8x16xf32>
    %4 = vector.shape_cast %3 : vector<1x2x8x16xf32> to vector<2x8x16xf32>
    %c0_4 = arith.constant 0 : index
    %c0_5 = arith.constant 0 : index
    %c0_6 = arith.constant 0 : index
    %c0_7 = arith.constant 0 : index
    %5 = vector.load %arg4[%c0_4, %c0_5, %c0_6, %c0_7] : memref<1x2x8x16xf32, #tpu.memory_space<vmem>>, vector<1x2x8x16xf32>
    %6 = vector.shape_cast %5 : vector<1x2x8x16xf32> to vector<2x8x16xf32>
    %c0_8 = arith.constant 0 : index
    %c0_9 = arith.constant 0 : index
    %c0_10 = arith.constant 0 : index
    %c0_11 = arith.constant 0 : index
    %7 = vector.load %arg5[%c0_8, %c0_9, %c0_10, %c0_11] : memref<1x2x8x16xf32, #tpu.memory_space<vmem>>, vector<1x2x8x16xf32>
    %8 = vector.shape_cast %7 : vector<1x2x8x16xf32> to vector<2x8x16xf32>
    "tpu.trace_start"() <{level = 10 : i32, message = "hqd,hkd->hqk"}> : () -> ()
    %cst = arith.constant dense<0.000000e+00> : vector<2x8x8xf32>
    %9 = tpu.matmul %4, %6, %cst {dimension_numbers = #tpu.dot_dimension_numbers<[2], [2], [1], [1], [0, 0, 0, 1, 1, 1], [0], [0]>} : vector<2x8x16xf32>, vector<2x8x16xf32>, vector<2x8x8xf32> -> vector<2x8x8xf32>
    "tpu.trace_stop"() : () -> ()
    %c0_12 = arith.constant 0 : index
    %c0_13 = arith.constant 0 : index
    %c0_14 = arith.constant 0 : index
    %10 = vector.load %arg6[%c0_12, %c0_13, %c0_14] : memref<1x1x8xf32, #tpu.memory_space<vmem>>, vector<1x1x8xf32>
    %11 = vector.shape_cast %10 : vector<1x1x8xf32> to vector<1x8xf32>
    %12 = vector.shape_cast %11 : vector<1x8xf32> to vector<1x1x8xf32>
    %13 = vector.broadcast %12 : vector<1x1x8xf32> to vector<2x8x8xf32>
    %14 = arith.addf %9, %13 : vector<2x8x8xf32>
    %c0_15 = arith.constant 0 : index
    %c0_16 = arith.constant 0 : index
    %c0_17 = arith.constant 0 : index
    %15 = vector.load %arg8[%c0_15, %c0_16, %c0_17] : memref<2x8x1xf32, #tpu.memory_space<vmem>>, vector<2x8x1xf32>
    %cst_18 = arith.constant dense<0xFF800000> : vector<2x8xf32>
    %16 = vector.multi_reduction <maximumf>, %14, %cst_18 [2] : vector<2x8x8xf32> to vector<2x8xf32>
    %17 = vector.shape_cast %16 : vector<2x8xf32> to vector<2x8x1xf32>
    %18 = arith.maximumf %15, %17 : vector<2x8x1xf32>
    %19 = arith.subf %15, %18 : vector<2x8x1xf32>
    %20 = math.exp %19 : vector<2x8x1xf32>
    %21 = vector.broadcast %18 : vector<2x8x1xf32> to vector<2x8x8xf32>
    %22 = arith.subf %14, %21 : vector<2x8x8xf32>
    %23 = math.exp %22 : vector<2x8x8xf32>
    %c0_19 = arith.constant 0 : index
    %c0_20 = arith.constant 0 : index
    %c0_21 = arith.constant 0 : index
    %24 = vector.load %arg9[%c0_19, %c0_20, %c0_21] : memref<2x8x1xf32, #tpu.memory_space<vmem>>, vector<2x8x1xf32>
    %25 = arith.mulf %20, %24 : vector<2x8x1xf32>
    %cst_22 = arith.constant dense<0.000000e+00> : vector<2x8xf32>
    %26 = vector.multi_reduction <add>, %23, %cst_22 [2] : vector<2x8x8xf32> to vector<2x8xf32>
    %27 = vector.shape_cast %26 : vector<2x8xf32> to vector<2x8x1xf32>
    %28 = arith.addf %25, %27 : vector<2x8x1xf32>
    %c0_23 = arith.constant 0 : index
    %c0_24 = arith.constant 0 : index
    %c0_25 = arith.constant 0 : index
    %29 = vector.load %arg9[%c0_23, %c0_24, %c0_25] : memref<2x8x1xf32, #tpu.memory_space<vmem>>, vector<2x8x1xf32>
    tpu.vector_store %arg9[%c0_23, %c0_24, %c0_25], %28 {strides = array<i32>} : memref<2x8x1xf32, #tpu.memory_space<vmem>>, vector<2x8x1xf32>,
    %c0_26 = arith.constant 0 : index
    %c0_27 = arith.constant 0 : index
    %c0_28 = arith.constant 0 : index
    %30 = vector.load %arg10[%c0_26, %c0_27, %c0_28] : memref<2x8x16xf32, #tpu.memory_space<vmem>>, vector<2x8x16xf32>
    %31 = vector.broadcast %20 : vector<2x8x1xf32> to vector<2x8x16xf32>
    %32 = arith.mulf %31, %30 : vector<2x8x16xf32>
    "tpu.trace_start"() <{level = 10 : i32, message = "hqk,hkd->hqd"}> : () -> ()
    %cst_29 = arith.constant dense<0.000000e+00> : vector<2x8x16xf32>
    %33 = tpu.matmul %23, %8, %cst_29 {dimension_numbers = #tpu.dot_dimension_numbers<[2], [1], [1], [2], [0, 0, 0, 1, 1, 2], [0], [0]>} : vector<2x8x8xf32>, vector<2x8x16xf32>, vector<2x8x16xf32> -> vector<2x8x16xf32>
    "tpu.trace_stop"() : () -> ()
    %34 = arith.addf %32, %33 : vector<2x8x16xf32>
    %c0_30 = arith.constant 0 : index
    %c0_31 = arith.constant 0 : index
    %c0_32 = arith.constant 0 : index
    %35 = vector.load %arg10[%c0_30, %c0_31, %c0_32] : memref<2x8x16xf32, #tpu.memory_space<vmem>>, vector<2x8x16xf32>
    tpu.vector_store %arg10[%c0_30, %c0_31, %c0_32], %34 {strides = array<i32>} : memref<2x8x16xf32, #tpu.memory_space<vmem>>, vector<2x8x16xf32>,
    %c0_33 = arith.constant 0 : index
    %c0_34 = arith.constant 0 : index
    %c0_35 = arith.constant 0 : index
    %36 = vector.load %arg8[%c0_33, %c0_34, %c0_35] : memref<2x8x1xf32, #tpu.memory_space<vmem>>, vector<2x8x1xf32>
    tpu.vector_store %arg8[%c0_33, %c0_34, %c0_35], %18 {strides = array<i32>} : memref<2x8x1xf32, #tpu.memory_space<vmem>>, vector<2x8x1xf32>,
    %c0_i32_36 = arith.constant 0 : i32
    %37 = arith.cmpi eq, %arg2, %c0_i32_36 : i32
    %38 = arith.extui %37 : i1 to i32
    %c0_i32_37 = arith.constant 0 : i32
    %39 = arith.cmpi ne, %38, %c0_i32_37 : i32
    scf.if %39 {
      %c0_38 = arith.constant 0 : index
      %c0_39 = arith.constant 0 : index
      %c0_40 = arith.constant 0 : index
      %40 = vector.load %arg9[%c0_38, %c0_39, %c0_40] : memref<2x8x1xf32, #tpu.memory_space<vmem>>, vector<2x8x1xf32>
      %41 = tpu.reciprocal %40 {approx = true} : vector<2x8x1xf32> -> vector<2x8x1xf32>
      %42 = arith.mulf %40, %41 : vector<2x8x1xf32>
      %cst_41 = arith.constant 2.000000e+00 : f32
      %43 = vector.broadcast %cst_41 : f32 to vector<2x8x1xf32>
      %44 = arith.subf %43, %42 : vector<2x8x1xf32>
      %45 = arith.mulf %41, %44 : vector<2x8x1xf32>
      %c0_42 = arith.constant 0 : index
      %c0_43 = arith.constant 0 : index
      %c0_44 = arith.constant 0 : index
      %46 = vector.load %arg10[%c0_42, %c0_43, %c0_44] : memref<2x8x16xf32, #tpu.memory_space<vmem>>, vector<2x8x16xf32>
      %47 = vector.broadcast %45 : vector<2x8x1xf32> to vector<2x8x16xf32>
      %48 = arith.mulf %46, %47 : vector<2x8x16xf32>
      %c0_45 = arith.constant 0 : index
      %c0_46 = arith.constant 0 : index
      %c0_47 = arith.constant 0 : index
      %c0_48 = arith.constant 0 : index
      %49 = vector.load %arg7[%c0_45, %c0_46, %c0_47, %c0_48] : memref<1x2x8x16xf32, #tpu.memory_space<vmem>>, vector<1x2x8x16xf32>
      %50 = vector.shape_cast %49 : vector<1x2x8x16xf32> to vector<2x8x16xf32>
      %51 = vector.shape_cast %48 : vector<2x8x16xf32> to vector<1x2x8x16xf32>
      tpu.vector_store %arg7[%c0_45, %c0_46, %c0_47, %c0_48], %51 {strides = array<i32>} : memref<1x2x8x16xf32, #tpu.memory_space<vmem>>, vector<1x2x8x16xf32>,
    } else {
    }
    return
  }
  func.func @transform_0(%arg0: i32, %arg1: i32, %arg2: i32) -> (i32, i32, i32, i32) {
    %c0_i32 = arith.constant 0 : i32
    %c0_i32_0 = arith.constant 0 : i32
    %c0_i32_1 = arith.constant 0 : i32
    return %arg0, %c0_i32, %arg1, %c0_i32_0 : i32, i32, i32, i32
  }
  func.func @transform_1(%arg0: i32, %arg1: i32, %arg2: i32) -> (i32, i32, i32, i32) {
    %c1_i32 = arith.constant 1 : i32
    %c0_i32 = arith.constant 0 : i32
    %c0_i32_0 = arith.constant 0 : i32
    return %arg0, %c1_i32, %arg2, %c0_i32 : i32, i32, i32, i32
  }
  func.func @transform_2(%arg0: i32, %arg1: i32, %arg2: i32) -> (i32, i32, i32, i32) {
    %c2_i32 = arith.constant 2 : i32
    %c0_i32 = arith.constant 0 : i32
    %c0_i32_0 = arith.constant 0 : i32
    return %arg0, %c2_i32, %arg2, %c0_i32 : i32, i32, i32, i32
  }
  func.func @transform_3(%arg0: i32, %arg1: i32, %arg2: i32) -> (i32, i32, i32) {
    %c0_i32 = arith.constant 0 : i32
    %c0_i32_0 = arith.constant 0 : i32
    return %arg0, %c0_i32, %arg2 : i32, i32, i32
  }
  func.func @transform_4(%arg0: i32, %arg1: i32, %arg2: i32) -> (i32, i32, i32, i32) {
    %c0_i32 = arith.constant 0 : i32
    %c0_i32_0 = arith.constant 0 : i32
    %c0_i32_1 = arith.constant 0 : i32
    return %arg0, %c0_i32, %arg1, %c0_i32_0 : i32, i32, i32, i32
  }
}

module attributes {stable_mosaic.version = 11 : i64} {
  func.func @_proj_ln_kernel(%arg0: i32, %arg1: i32, %arg2: i32, %arg3: memref<1x1x8x16xf32, #tpu.memory_space<vmem>>, %arg4: memref<1x16x32xf32, #tpu.memory_space<vmem>>, %arg5: memref<1x32xf32, #tpu.memory_space<vmem>>, %arg6: memref<1x8x32xf32, #tpu.memory_space<vmem>>, %arg7: memref<8x32xf32, #tpu.memory_space<vmem>>) attributes {dimension_semantics = [#tpu.dimension_semantics<parallel>, #tpu.dimension_semantics<parallel>, #tpu.dimension_semantics<arbitrary>], iteration_bounds = array<i64: 2, 1, 2>, scalar_prefetch = 0 : i64, scratch_operands = 1 : i64, tpu.core_type = #tpu.core_type<tc>, window_params = [{transform_indices = @transform_0, window_bounds = array<i64: 1, 1, 8, 16>}, {transform_indices = @transform_1, window_bounds = array<i64: 1, 16, 32>}, {pipeline_mode = #tpu.pipeline_mode<synchronous>, transform_indices = @transform_2, window_bounds = array<i64: 1, 32>}, {transform_indices = @transform_3, window_bounds = array<i64: 1, 8, 32>}]} {
    %c0_i32 = arith.constant 0 : i32
    %0 = arith.cmpi eq, %arg2, %c0_i32 : i32
    %1 = arith.extui %0 : i1 to i32
    %c0_i32_0 = arith.constant 0 : i32
    %2 = arith.cmpi ne, %1, %c0_i32_0 : i32
    scf.if %2 {
      %cst_12 = arith.constant 0.000000e+00 : f32
      %14 = vector.broadcast %cst_12 : f32 to vector<8x32xf32>
      %c0_13 = arith.constant 0 : index
      %c0_14 = arith.constant 0 : index
      %15 = vector.load %arg7[%c0_13, %c0_14] : memref<8x32xf32, #tpu.memory_space<vmem>>, vector<8x32xf32>
      tpu.vector_store %arg7[%c0_13, %c0_14], %14 {strides = array<i32>} : memref<8x32xf32, #tpu.memory_space<vmem>>, vector<8x32xf32>,
    } else {
    }
    %c0 = arith.constant 0 : index
    %c0_1 = arith.constant 0 : index
    %3 = vector.load %arg7[%c0, %c0_1] : memref<8x32xf32, #tpu.memory_space<vmem>>, vector<8x32xf32>
    %c0_2 = arith.constant 0 : index
    %c0_3 = arith.constant 0 : index
    %c0_4 = arith.constant 0 : index
    %c0_5 = arith.constant 0 : index
    %4 = vector.load %arg3[%c0_2, %c0_3, %c0_4, %c0_5] : memref<1x1x8x16xf32, #tpu.memory_space<vmem>>, vector<1x1x8x16xf32>
    %5 = vector.shape_cast %4 : vector<1x1x8x16xf32> to vector<8x16xf32>
    %c0_6 = arith.constant 0 : index
    %c0_7 = arith.constant 0 : index
    %c0_8 = arith.constant 0 : index
    %6 = vector.load %arg4[%c0_6, %c0_7, %c0_8] : memref<1x16x32xf32, #tpu.memory_space<vmem>>, vector<1x16x32xf32>
    %7 = vector.shape_cast %6 : vector<1x16x32xf32> to vector<16x32xf32>
    %cst = arith.constant dense<0.000000e+00> : vector<8x32xf32>
    %8 = tpu.matmul %5, %7, %cst {dimension_numbers = #tpu.dot_dimension_numbers<[1], [0], [0], [1], [0, 0, 1, 1], [], []>} : vector<8x16xf32>, vector<16x32xf32>, vector<8x32xf32> -> vector<8x32xf32>
    %9 = arith.addf %3, %8 : vector<8x32xf32>
    %c0_9 = arith.constant 0 : index
    %c0_10 = arith.constant 0 : index
    %10 = vector.load %arg7[%c0_9, %c0_10] : memref<8x32xf32, #tpu.memory_space<vmem>>, vector<8x32xf32>
    tpu.vector_store %arg7[%c0_9, %c0_10], %9 {strides = array<i32>} : memref<8x32xf32, #tpu.memory_space<vmem>>, vector<8x32xf32>,
    %c1_i32 = arith.constant 1 : i32
    %11 = arith.cmpi eq, %arg2, %c1_i32 : i32
    %12 = arith.extui %11 : i1 to i32
    %c0_i32_11 = arith.constant 0 : i32
    %13 = arith.cmpi ne, %12, %c0_i32_11 : i32
    scf.if %13 {
      %c0_12 = arith.constant 0 : index
      %c0_13 = arith.constant 0 : index
      %14 = vector.load %arg7[%c0_12, %c0_13] : memref<8x32xf32, #tpu.memory_space<vmem>>, vector<8x32xf32>
      %cst_14 = arith.constant dense<0.000000e+00> : vector<8xf32>
      %15 = vector.multi_reduction <add>, %14, %cst_14 [1] : vector<8x32xf32> to vector<8xf32>
      %16 = vector.shape_cast %15 : vector<8xf32> to vector<8x1xf32>
      %cst_15 = arith.constant 3.200000e+01 : f32
      %17 = vector.broadcast %cst_15 : f32 to vector<8x1xf32>
      %18 = arith.divf %16, %17 : vector<8x1xf32>
      %19 = vector.broadcast %18 : vector<8x1xf32> to vector<8x32xf32>
      %20 = arith.subf %14, %19 : vector<8x32xf32>
      %21 = arith.mulf %20, %20 : vector<8x32xf32>
      %cst_16 = arith.constant dense<0.000000e+00> : vector<8xf32>
      %22 = vector.multi_reduction <add>, %21, %cst_16 [1] : vector<8x32xf32> to vector<8xf32>
      %23 = vector.shape_cast %22 : vector<8xf32> to vector<8x1xf32>
      %cst_17 = arith.constant 3.200000e+01 : f32
      %24 = vector.broadcast %cst_17 : f32 to vector<8x1xf32>
      %25 = arith.divf %23, %24 : vector<8x1xf32>
      %26 = vector.broadcast %18 : vector<8x1xf32> to vector<8x32xf32>
      %27 = arith.subf %14, %26 : vector<8x32xf32>
      %cst_18 = arith.constant 9.99999974E-6 : f32
      %28 = vector.broadcast %cst_18 : f32 to vector<8x1xf32>
      %29 = arith.addf %25, %28 : vector<8x1xf32>
      %30 = math.rsqrt %29 : vector<8x1xf32>
      %31 = vector.broadcast %30 : vector<8x1xf32> to vector<8x32xf32>
      %32 = arith.mulf %27, %31 : vector<8x32xf32>
      %c0_19 = arith.constant 0 : index
      %c0_20 = arith.constant 0 : index
      %33 = vector.load %arg5[%c0_19, %c0_20] : memref<1x32xf32, #tpu.memory_space<vmem>>, vector<1x32xf32>
      %34 = vector.broadcast %33 : vector<1x32xf32> to vector<8x32xf32>
      %35 = arith.mulf %32, %34 : vector<8x32xf32>
      %c0_21 = arith.constant 0 : index
      %c0_22 = arith.constant 0 : index
      %c0_23 = arith.constant 0 : index
      %36 = vector.load %arg6[%c0_21, %c0_22, %c0_23] : memref<1x8x32xf32, #tpu.memory_space<vmem>>, vector<1x8x32xf32>
      %37 = vector.shape_cast %36 : vector<1x8x32xf32> to vector<8x32xf32>
      %38 = vector.shape_cast %35 : vector<8x32xf32> to vector<1x8x32xf32>
      tpu.vector_store %arg6[%c0_21, %c0_22, %c0_23], %38 {strides = array<i32>} : memref<1x8x32xf32, #tpu.memory_space<vmem>>, vector<1x8x32xf32>,
    } else {
    }
    return
  }
  func.func @transform_0(%arg0: i32, %arg1: i32, %arg2: i32) -> (i32, i32, i32, i32) {
    %c0_i32 = arith.constant 0 : i32
    %c0_i32_0 = arith.constant 0 : i32
    return %arg0, %arg2, %arg1, %c0_i32 : i32, i32, i32, i32
  }
  func.func @transform_1(%arg0: i32, %arg1: i32, %arg2: i32) -> (i32, i32, i32) {
    %c0_i32 = arith.constant 0 : i32
    %c0_i32_0 = arith.constant 0 : i32
    %c0_i32_1 = arith.constant 0 : i32
    return %arg2, %c0_i32, %c0_i32_0 : i32, i32, i32
  }
  func.func @transform_2(%arg0: i32, %arg1: i32, %arg2: i32) -> (i32, i32) {
    %c0_i32 = arith.constant 0 : i32
    %c0_i32_0 = arith.constant 0 : i32
    %c0_i32_1 = arith.constant 0 : i32
    return %c0_i32, %c0_i32_0 : i32, i32
  }
  func.func @transform_3(%arg0: i32, %arg1: i32, %arg2: i32) -> (i32, i32, i32) {
    %c0_i32 = arith.constant 0 : i32
    %c0_i32_0 = arith.constant 0 : i32
    return %arg0, %arg1, %c0_i32 : i32, i32, i32
  }
}

</mosaic_0001>

<llo_original>
// kernel: attention_forward.3
$region0: #{attention_forward.3}
  #allocation0 [shape = 'u32[]', space=smem, size = 0x4, offset = 0x4, fixed_abs, tag = 'smem constant byte address 0x4 - core index']
  #allocation1 [shape = 'u32[72,128]{1,0:T(1,128)}', space=vmem, size = 0x9000, scoped, tag = 'internal scratch']
  #allocation2 [shape = 'f32[16,96]{1,0:T(8,128)}', space=vmem, size = 0x2000, scoped, tag = 'scratch operand']
  %s0 = inlined_call_operand.vmem [shape: f32[16,32], index: 0, kind: input, shape index: {}]
  %s1 = inlined_call_operand.vmem [shape: f32[32,96], index: 1, kind: input, shape index: {}]
  %s2 = inlined_call_operand.vmem [shape: f32[16,96], index: 2, kind: output, shape index: {}]
  %s3 = sld [smem:[#allocation0]]
  $region26: #{attention_forward.3} parent=0
    _
  %s5 = ssub.s32 1, %s3
  %s6 = scalar_select 0, %s5, %s3
  // Predicated region
  $region2: #{attention_forward.3} parent=0 // pred_check
    _
  $region3: #{attention_forward.3} parent=0 // pred_check_branch
    %8 = sbr.rel (0) target = $region5
  $region4: #{attention_forward.3} parent=0 // pred_region
    _
  $region5: #{attention_forward.3} parent=0 // pred_fallthru
    _
  // Predicated region
  $region6: #{attention_forward.3} parent=0 // pred_check
    _
  $region7: #{attention_forward.3} parent=0 // pred_check_branch
    %10 = sbr.rel (0) target = $region9
  $region8: #{attention_forward.3} parent=0 // pred_region
    _
  $region9: #{attention_forward.3} parent=0 // pred_fallthru
    _
  %p11 = scmp.eq.s32.totalorder 0, 0
  // Predicated region
  $region10: #{attention_forward.3} parent=0 // pred_check
    %p12 = pneg %p11
  $region11: #{attention_forward.3} parent=0 // pred_check_branch
    %14 = sbr.rel (%p12) target = $region13
  $region12: #{attention_forward.3} parent=0 // pred_region
    %vm15 = vcmask 785408
    %16 = vst.msk [vmem:[#allocation2] sm:$0xff] %vm15, 0.0
    %17 = vst.msk [vmem:[#allocation2 + $0x8] sm:$0xff] %vm15, 0.0
  $region13: #{attention_forward.3} parent=0 // pred_fallthru
    _
  %v18 = vld [vmem:[#allocation2] sm:$0xff]
  %v19 = vld [vmem:[#allocation2 + $0x8] sm:$0xff]
  %v20 = vld [vmem:[%s0] sm:$0xff]
  %v21 = vld [vmem:[%s0 + $0x8] sm:$0xff]
  %v22 = vld [vmem:[%s1] sm:$0xff]
  %v23 = vld [vmem:[%s1 + $0x8] sm:$0xff]
  %v24 = vld [vmem:[%s1 + $0x10] sm:$0xff]
  %v25 = vld [vmem:[%s1 + $0x18] sm:$0xff]
  %vm26 = vcmask 261120
  %v28 = vsel %vm26, %v20, 0
  %v31 = vsel %vm26, %v21, 0
  %33 = vmatpush.msra.mxu0 0.0
  %34 = vmatpush.msra.mxu0 0.0
  %35 = vmatpush.msra.mxu0 0.0
  %36 = vmatpush.msra.mxu0 0.0
  %37 = vmatpush.msra.mxu0 0.0
  %38 = vmatpush.msra.mxu0 0.0
  %39 = vmatpush.msra.mxu0 0.0
  %40 = vmatpush.msra.mxu0 0.0
  %41 = vmatpush.msra.mxu0 0.0
  %42 = vmatpush.msra.mxu0 0.0
  %43 = vmatpush.msra.mxu0 0.0
  %44 = vmatpush.msra.mxu0 0.0
  %45 = vmatpush.msra.mxu0 %v25
  %46 = vmatpush.msra.mxu0 %v24
  %47 = vmatpush.msra.mxu0 %v23
  %48 = vmatpush.msra.mxu0 %v22
  %49 = vmatmul.f32.gmra.mxu0 %v28
  %v50 = vpop.f32.mrf.mxu0
  %v51 = vadd.f32 0.0, %v50
  %52 = vmatmul.f32.gmra.mxu0 %v31
  %v53 = vpop.f32.mrf.mxu0
  %v54 = vadd.f32 0.0, %v53
  %55 = vdwg.mxu0
  %v56 = vadd.f32 %v18, %v51
  %v57 = vadd.f32 %v19, %v54
  %vm58 = vcmask 785408
  %59 = vst.msk [vmem:[#allocation2] sm:$0xff] %vm58, %v56
  %60 = vst.msk [vmem:[#allocation2 + $0x8] sm:$0xff] %vm58, %v57
  // Predicated region
  $region14: #{attention_forward.3} parent=0 // pred_check
    %p61 = pneg %p11
  $region15: #{attention_forward.3} parent=0 // pred_check_branch
    %63 = sbr.rel (%p61) target = $region17
  $region16: #{attention_forward.3} parent=0 // pred_region
    %v64 = vld [vmem:[#allocation2] sm:$0xff]
    %v65 = vld [vmem:[#allocation2 + $0x8] sm:$0xff]
    %66 = vst.msk [vmem:[%s2] sm:$0xff] %vm58, %v64
    %67 = vst.msk [vmem:[%s2 + $0x8] sm:$0xff] %vm58, %v65
  $region17: #{attention_forward.3} parent=0 // pred_fallthru
    _
  // Predicated region
  $region18: #{attention_forward.3} parent=0 // pred_check
    _
  $region19: #{attention_forward.3} parent=0 // pred_check_branch
    %69 = sbr.rel (0) target = $region21
  $region20: #{attention_forward.3} parent=0 // pred_region
    _
  $region21: #{attention_forward.3} parent=0 // pred_fallthru
    _
  // Predicated region
  $region22: #{attention_forward.3} parent=0 // pred_check
    _
  $region23: #{attention_forward.3} parent=0 // pred_check_branch
    %71 = sbr.rel (0) target = $region25
  $region24: #{attention_forward.3} parent=0 // pred_region
    _
  $region25: #{attention_forward.3} parent=0 // pred_fallthru
    _

// kernel: attention_forward.5
$region0: #{attention_forward.5}
  #allocation0 [shape = 'u32[]', space=smem, size = 0x4, offset = 0x4, fixed_abs, tag = 'smem constant byte address 0x4 - core index']
  #allocation1 [shape = 'u32[72,128]{1,0:T(1,128)}', space=vmem, size = 0x9000, scoped, tag = 'internal scratch']
  #allocation2 [shape = 'f32[8,32]{1,0:T(8,128)}', space=vmem, size = 0x1000, scoped, tag = 'scratch operand']
  %s0 = inlined_call_operand.vmem [shape: f32[2,2,8,16], index: 0, kind: input, shape index: {}]
  %s1 = inlined_call_operand.vmem [shape: f32[2,16,32], index: 1, kind: input, shape index: {}]
  %s2 = inlined_call_operand.vmem [shape: f32[1,32], index: 2, kind: input, shape index: {}]
  %s3 = inlined_call_operand.hbm [shape: f32[2,8,32], index: 3, kind: output, shape index: {}]
  %s4 = sld [smem:[#allocation0]]
  $region53: #{attention_forward.5} parent=0
    _
  %s6 = ssub.s32 1, %s4
  %s7 = scalar_select 0, %s6, %s4
  $region1: #{attention_forward.5} parent=0
    #allocation3 [shape = 'u8[8192]{0}', space=vmem, size = 0x2000, scoped, tag = 'output window, operand 0']
    #allocation4 [shape = 's32[2]{0}', space=sflag, size = 0x8, scoped, tag = 'scoped memory for attention_forward.5']
    %8 = vsyncpa [#allocation4], 0
    %s9 = scalar_lea.sflag [#allocation4], 1
    %10 = vsyncpa %s9, 0
    loop: start=0, step=1, limit=6
    $region2: #{attention_forward.5} parent=1 // loop_pre_header
      _
    $region3: #{attention_forward.5} parent=1 // loop_header
      %s12 = sphi 0, %s16
      %p13 = scmp.ge.s32.totalorder %s12, 6
      %s19 = sphi 0, %s38
      %s20 = sphi 0, %s34
      %s21 = sphi 0, %s30
      %s22 = sphi 0, %s19
      %s23 = sphi 0, %s20
      %s24 = sphi 0, %s21
      %s25 = sphi 0, %s22
      %s26 = sphi 0, %s23
      %s27 = sphi 0, %s24
      %s45 = sphi 0, %s47
      %s48 = sphi 0, %s45
      %s49 = sphi 0, %s48
      %s65 = sphi 0, %s49
      %s71 = sphi 0, %s73
      %s74 = sphi 0, %s71
      %s75 = sphi 0, %s74
      %s91 = sphi 0, %s75
      %s95 = sphi 0, %s95
      %s97 = sphi 0, %s95
      %s98 = sphi 0, %s97
      %s112 = sphi 0, %s98
      %s120 = sphi 0, %s122
      %s123 = sphi 0, %s120
      %s124 = sphi 0, %s123
      %s140 = sphi 0, %s124
    $region4: #{attention_forward.5} parent=1 // loop_header_branch
      %15 = sbr.rel (%p13) target = $region8
    $region5: #{attention_forward.5} parent=1 // loop_body
      %s17 = ssub.s32 %s12, 1
      %s18 = ssub.s32 %s12, 2
      %s28 = sadd.s32 1, %s21
      %p29 = scmp.ge.s32.totalorder %s28, 2
      %s30 = scalar_select %p29, 0, %s28
      %s31 = sadd.s32 1, %s20
      %s32 = scalar_select %p29, %s31, %s20
      %p33 = scmp.ge.s32.totalorder %s32, 1
      %s34 = scalar_select %p33, 0, %s32
      %s35 = sadd.s32 1, %s19
      %s36 = scalar_select %p33, %s35, %s19
      %p37 = scmp.ge.s32.totalorder %s36, 2
      %s38 = scalar_select %p37, 0, %s36
      %s39 = ssub.s32 %s19, %s38
      %s40 = ssub.s32 %s21, %s30
      %s41 = sor.u32 %s39, %s40
      %s42 = ssub.s32 %s20, %s34
      %s43 = sor.u32 %s41, %s42
      %p44 = scmp.eq.s32.totalorder %s43, 0
      %s46 = sadd.s32 %s45, 1
      %s47 = scalar_select %p44, %s45, %s46
      %p50 = pneg %p44
      %p51 = scmp.eq.s32.totalorder %s12, 3
      %p52 = por %p50, %p51
      %p53 = scmp.ne.s32.totalorder %s45, %s48
      %p54 = scmp.eq.s32.totalorder %s12, 0
      %p55 = por %p53, %p54
      %p56 = scmp.ne.s32.totalorder %s45, %s48
      %p57 = scmp.eq.s32.totalorder %s17, 3
      %p58 = por %p56, %p57
      %p59 = scmp.ne.s32.totalorder %s48, %s49
      %p60 = scmp.eq.s32.totalorder %s17, 0
      %p61 = por %p59, %p60
      %p62 = scmp.ne.s32.totalorder %s48, %s49
      %p63 = scmp.eq.s32.totalorder %s18, 3
      %p64 = por %p62, %p63
      %p66 = scmp.ne.s32.totalorder %s49, %s65
      %p67 = scmp.eq.s32.totalorder %s18, 0
      %p68 = por %p66, %p67
      %s69 = ssub.s32 %s21, %s30
      %p70 = scmp.eq.s32.totalorder %s69, 0
      %s72 = sadd.s32 %s71, 1
      %s73 = scalar_select %p70, %s71, %s72
      %p76 = pneg %p70
      %p77 = scmp.eq.s32.totalorder %s12, 3
      %p78 = por %p76, %p77
      %p79 = scmp.ne.s32.totalorder %s71, %s74
      %p80 = scmp.eq.s32.totalorder %s12, 0
      %p81 = por %p79, %p80
      %p82 = scmp.ne.s32.totalorder %s71, %s74
      %p83 = scmp.eq.s32.totalorder %s17, 3
      %p84 = por %p82, %p83
      %p85 = scmp.ne.s32.totalorder %s74, %s75
      %p86 = scmp.eq.s32.totalorder %s17, 0
      %p87 = por %p85, %p86
      %p88 = scmp.ne.s32.totalorder %s74, %s75
      %p89 = scmp.eq.s32.totalorder %s18, 3
      %p90 = por %p88, %p89
      %p92 = scmp.ne.s32.totalorder %s75, %s91
      %p93 = scmp.eq.s32.totalorder %s18, 0
      %p94 = por %p92, %p93
      %s96 = sadd.s32 %s95, 1
      %p99 = scmp.eq.s32.totalorder %s12, 3
      %p100 = scmp.ne.s32.totalorder %s95, %s97
      %p101 = scmp.eq.s32.totalorder %s12, 0
      %p102 = por %p100, %p101
      %p103 = scmp.ne.s32.totalorder %s95, %s97
      %p104 = scmp.eq.s32.totalorder %s17, 3
      %p105 = por %p103, %p104
      %p106 = scmp.ne.s32.totalorder %s97, %s98
      %p107 = scmp.eq.s32.totalorder %s17, 0
      %p108 = por %p106, %p107
      %p109 = scmp.ne.s32.totalorder %s97, %s98
      %p110 = scmp.eq.s32.totalorder %s18, 3
      %p111 = por %p109, %p110
      %p113 = scmp.ne.s32.totalorder %s98, %s112
      %p114 = scmp.eq.s32.totalorder %s18, 0
      %p115 = por %p113, %p114
      %s116 = ssub.s32 %s19, %s38
      %s117 = ssub.s32 %s20, %s34
      %s118 = sor.u32 %s116, %s117
      %p119 = scmp.eq.s32.totalorder %s118, 0
      %s121 = sadd.s32 %s120, 1
      %s122 = scalar_select %p119, %s120, %s121
      %p125 = pneg %p119
      %p126 = scmp.eq.s32.totalorder %s12, 3
      %p127 = por %p125, %p126
      %p128 = scmp.ne.s32.totalorder %s120, %s123
      %p129 = scmp.eq.s32.totalorder %s12, 0
      %p130 = por %p128, %p129
      %p131 = scmp.ne.s32.totalorder %s120, %s123
      %p132 = scmp.eq.s32.totalorder %s17, 3
      %p133 = por %p131, %p132
      %p134 = scmp.ne.s32.totalorder %s123, %s124
      %p135 = scmp.eq.s32.totalorder %s17, 0
      %p136 = por %p134, %p135
      %p137 = scmp.ne.s32.totalorder %s123, %s124
      %p138 = scmp.eq.s32.totalorder %s18, 3
      %p139 = por %p137, %p138
      %p141 = scmp.ne.s32.totalorder %s124, %s140
      %p142 = scmp.eq.s32.totalorder %s18, 0
      %p143 = por %p141, %p142
      %p144 = scmp.le.s32.totalorder 1, %s12
      %p145 = scmp.lt.s32.totalorder %s12, 5
      %p146 = pnand %p144, %p145
      %p147 = pneg %p146
      // Predicated region
      $region9: #{attention_forward.5} parent=5 // pred_check
        _
      $region10: #{attention_forward.5} parent=5 // pred_check_branch
        %149 = sbr.rel (%p146) target = $region12
      $region11: #{attention_forward.5} parent=5 // pred_region
        %s150 = ssub.s32 %s12, 1
        // Predicated region
        $region13: #{attention_forward.5} parent=11 // pred_check
          %p151 = pneg %p108
        $region14: #{attention_forward.5} parent=11 // pred_check_branch
          %153 = sbr.rel (%p151) target = $region16
        $region15: #{attention_forward.5} parent=11 // pred_region
          _
        $region16: #{attention_forward.5} parent=11 // pred_fallthru
          _
      $region12: #{attention_forward.5} parent=5 // pred_fallthru
        _
      %p154 = scmp.lt.s32.totalorder %s12, 4
      // Predicated region
      $region17: #{attention_forward.5} parent=5 // pred_check
        %p155 = pneg %p154
      $region18: #{attention_forward.5} parent=5 // pred_check_branch
        %157 = sbr.rel (%p155) target = $region20
      $region19: #{attention_forward.5} parent=5 // pred_region
        // Predicated region
        $region21: #{attention_forward.5} parent=19 // pred_check
          %p158 = pneg %p55
        $region22: #{attention_forward.5} parent=19 // pred_check_branch
          %160 = sbr.rel (%p158) target = $region24
        $region23: #{attention_forward.5} parent=19 // pred_region
          %p161 = scmp.lt.s32.totalorder %s19, 1
          %s162 = scalar_select %p161, %s19, 1
          %p163 = scmp.lt.s32.totalorder %s21, 1
          %s164 = scalar_select %p163, %s21, 1
          %p165 = scmp.lt.s32.totalorder %s20, 0
          %s166 = scalar_select %p165, %s20, 0
          %s167 = sadd.s32 %s166, %s164
          %s168 = smul.addr %s162, 2
          %s169 = sadd.s32 %s167, %s168
          %s170 = smul.addr %s169, 8
          %s171 = scalar_lea.vmem %s0, %s170
        $region24: #{attention_forward.5} parent=19 // pred_fallthru
          _
        // Predicated region
        $region25: #{attention_forward.5} parent=19 // pred_check
          %p172 = pneg %p81
        $region26: #{attention_forward.5} parent=19 // pred_check_branch
          %174 = sbr.rel (%p172) target = $region28
        $region27: #{attention_forward.5} parent=19 // pred_region
          %p175 = scmp.lt.s32.totalorder %s21, 1
          %s176 = scalar_select %p175, %s21, 1
          %s177 = smul.addr %s176, 2
          %s178 = smul.addr %s177, 8
          %s179 = scalar_lea.vmem %s1, %s178
        $region28: #{attention_forward.5} parent=19 // pred_fallthru
          _
      $region20: #{attention_forward.5} parent=5 // pred_fallthru
        _
      %p180 = scmp.le.s32.totalorder 1, %s12
      %p181 = scmp.lt.s32.totalorder %s12, 5
      %p182 = pnand %p180, %p181
      %p183 = pneg %p182
      // Predicated region
      $region29: #{attention_forward.5} parent=5 // pred_check
        _
      $region30: #{attention_forward.5} parent=5 // pred_check_branch
        %185 = sbr.rel (%p182) target = $region32
      $region31: #{attention_forward.5} parent=5 // pred_region
        %s186 = ssub.s32 %s12, 1
        %p187 = scmp.lt.s32.totalorder %s22, 1
        %s188 = scalar_select %p187, %s22, 1
        %p189 = scmp.lt.s32.totalorder %s24, 1
        %s190 = scalar_select %p189, %s24, 1
        %p191 = scmp.lt.s32.totalorder %s23, 0
        %s192 = scalar_select %p191, %s23, 0
        %s193 = sadd.s32 %s192, %s190
        %s194 = smul.addr %s188, 2
        %s195 = sadd.s32 %s193, %s194
        %s196 = smul.addr %s195, 8
        %s197 = scalar_lea.vmem %s0, %s196
        %p198 = pneg %p61
        %p199 = pneg %p58
        %p200 = scmp.lt.s32.totalorder %s24, 1
        %s201 = scalar_select %p200, %s24, 1
        %s202 = smul.addr %s201, 2
        %s203 = smul.addr %s202, 8
        %s204 = scalar_lea.vmem %s1, %s203
        %p205 = pneg %p87
        %p206 = pneg %p84
        %p207 = pneg %p108
        %p208 = pneg %p105
        %p209 = pneg %p136
        %p210 = pneg %p133
        %s211 = sand.u32 %s123, 1
        %s212 = scalar_lea.sflag [#allocation4], %s211
        %s213 = sand.u32 %s123, 1
        %s214 = smul.addr %s213, 8
        %s215 = scalar_lea.vmem [#allocation3], %s214
        %p216 = scmp.lt.s32.totalorder %s22, 1
        %s217 = scalar_select %p216, %s22, 1
        %p218 = scmp.lt.s32.totalorder %s24, 1
        %s219 = scalar_select %p218, %s24, 1
        %p220 = scmp.lt.s32.totalorder %s23, 0
        %s221 = scalar_select %p220, %s23, 0
        %s222 = sadd.s32 %s221, %s219
        %s223 = smul.addr %s217, 2
        %s224 = sadd.s32 %s222, %s223
        %s225 = smul.addr %s224, 8
        %s226 = scalar_lea.vmem %s0, %s225
        %p227 = scmp.lt.s32.totalorder %s24, 1
        %s228 = scalar_select %p227, %s24, 1
        %s229 = smul.addr %s228, 2
        %s230 = smul.addr %s229, 8
        %s231 = scalar_lea.vmem %s1, %s230
        %p232 = scmp.eq.s32.totalorder %s24, 0
        // Predicated region
        $region33: #{attention_forward.5} parent=31 // pred_check
          %p233 = pneg %p232
        $region34: #{attention_forward.5} parent=31 // pred_check_branch
          %235 = sbr.rel (%p233) target = $region36
        $region35: #{attention_forward.5} parent=31 // pred_region
          %vm236 = vcmask 261120
          %237 = vst.msk [vmem:[#allocation2] sm:$0xff] %vm236, 0.0
        $region36: #{attention_forward.5} parent=31 // pred_fallthru
          _
        %v238 = vld [vmem:[#allocation2] sm:$0xff]
        %v239 = vld [vmem:[%s226] sm:$0xff]
        %v240 = vld [vmem:[%s231] sm:$0xff]
        %v241 = vld [vmem:[%s231 + $0x8] sm:$0xff]
        %vm242 = vcmask 130048
        %v244 = vsel %vm242, %v239, 0
        %246 = vmatpush.msra.mxu0 0.0
        %247 = vmatpush.msra.mxu0 0.0
        %248 = vmatpush.msra.mxu0 0.0
        %249 = vmatpush.msra.mxu0 0.0
        %250 = vmatpush.msra.mxu0 0.0
        %251 = vmatpush.msra.mxu0 0.0
        %252 = vmatpush.msra.mxu0 0.0
        %253 = vmatpush.msra.mxu0 0.0
        %254 = vmatpush.msra.mxu0 0.0
        %255 = vmatpush.msra.mxu0 0.0
        %256 = vmatpush.msra.mxu0 0.0
        %257 = vmatpush.msra.mxu0 0.0
        %258 = vmatpush.msra.mxu0 0.0
        %259 = vmatpush.msra.mxu0 0.0
        %260 = vmatpush.msra.mxu0 %v241
        %261 = vmatpush.msra.mxu0 %v240
        %262 = vmatmul.f32.gmra.mxu0 %v244
        %v263 = vpop.f32.mrf.mxu0
        %v264 = vadd.f32 0.0, %v263
        %265 = vdwg.mxu0
        %v266 = vadd.f32 %v238, %v264
        %vm267 = vcmask 261120
        %268 = vst.msk [vmem:[#allocation2] sm:$0xff] %vm267, %v266
        %p269 = scmp.eq.s32.totalorder %s24, 1
        // Predicated region
        $region37: #{attention_forward.5} parent=31 // pred_check
          %p270 = pneg %p269
        $region38: #{attention_forward.5} parent=31 // pred_check_branch
          %272 = sbr.rel (%p270) target = $region40
        $region39: #{attention_forward.5} parent=31 // pred_region
          %v273 = vld [vmem:[#allocation2] sm:$0xff]
          %v274 = vsel %vm267, %v273, 0.0
          %275 = vadd.xlane.f32.xlu0 %v274
          %v276 = vpop.xlane.xlu0 %275
          %v277 = vrcp.pop 32.0
          %v278 = vmul.f32 32.0, %v277
          %v279 = vsub.f32 1.0, %v278
          %v280 = vmul.f32 %v277, %v279
          %v281 = vadd.f32 %v277, %v280
          %vm282 = vweird.f32 %v277
          %v283 = vsel %vm282, %v277, %v281
          %v284 = vmul.f32 %v276, %v283
          %v285 = vsub.f32 %v273, %v284
          %v286 = vmul.f32 %v285, %v285
          %v287 = vsel %vm267, %v286, 0.0
          %288 = vadd.xlane.f32.xlu0 %v287
          %v289 = vpop.xlane.xlu0 %288
          %v290 = vmul.f32 %v289, %v283
          %v291 = vadd.f32 %v290, 1e-05
          %v292 = vrsqrt.pop %v291
          %v293 = vmul.f32 %v292, %v291
          %v294 = vmul.f32 %v293, %v292
          %v295 = vmul.f32 0.5, %v294
          %v296 = vsub.f32 1.5, %v295
          %v297 = vmul.f32 %v292, %v296
          %vm298 = vweird.f32 %v291
          %vm299 = vweird.f32 %v292
          %vm300 = vmor %vm298, %vm299
          %v301 = vsel %vm300, %v292, %v297
          %v302 = vmul.f32 %v285, %v301
          %v303 = vld [vmem:[%s2] sm:$0x1]
          %v305 = vperm.slane %v303, 0
          %v307 = vmul.f32 %v302, %v305
          %308 = vst.msk [vmem:[%s215] sm:$0xff] %vm267, %v307
        $region40: #{attention_forward.5} parent=31 // pred_fallthru
          _
        %s309 = sand.u32 %s123, 1
        %s310 = scalar_lea.sflag [#allocation4], %s309
        %s311 = sand.u32 %s123, 1
        %s312 = smul.addr %s311, 8
        %s313 = scalar_lea.vmem [#allocation3], %s312
        // Predicated region
        $region41: #{attention_forward.5} parent=31 // pred_check
          %p314 = pneg %p133
        $region42: #{attention_forward.5} parent=31 // pred_check_branch
          %316 = sbr.rel (%p314) target = $region44
        $region43: #{attention_forward.5} parent=31 // pred_region
          %318 = vsyncadd %s310, 0
          %s319 = sadd.s32 %s23, %s22
          %s320 = smul.addr %s319, 8
          %s321 = scalar_lea.hbm %s3, %s320
          %s323 = sshll.u32 %s313, 4
          %s324 = int_to_ptr.vmem [resolvable:$true] %s323
          %s325 = sshll.u32 %s321, 4
          %s326 = int_to_ptr.hbm [resolvable:$true] %s325
          %328 = dma.vmem_to_hbm [thread:$0]  %s324, 128, %s326, %s310
        $region44: #{attention_forward.5} parent=31 // pred_fallthru
          _
      $region32: #{attention_forward.5} parent=5 // pred_fallthru
        _
      %p329 = scmp.le.s32.totalorder 2, %s12
      // Predicated region
      $region45: #{attention_forward.5} parent=5 // pred_check
        %p330 = pneg %p329
      $region46: #{attention_forward.5} parent=5 // pred_check_branch
        %332 = sbr.rel (%p330) target = $region48
      $region47: #{attention_forward.5} parent=5 // pred_region
        %s333 = ssub.s32 %s12, 2
        // Predicated region
        $region49: #{attention_forward.5} parent=47 // pred_check
          %p334 = pneg %p139
        $region50: #{attention_forward.5} parent=47 // pred_check_branch
          %336 = sbr.rel (%p334) target = $region52
        $region51: #{attention_forward.5} parent=47 // pred_region
          %s337 = sand.u32 %s124, 1
          %s338 = scalar_lea.sflag [#allocation4], %s337
          %s339 = sand.u32 %s124, 1
          %s340 = smul.addr %s339, 8
          %s341 = scalar_lea.vmem [#allocation3], %s340
          %343 = dma.done %s338, 128
        $region52: #{attention_forward.5} parent=47 // pred_fallthru
          _
      $region48: #{attention_forward.5} parent=5 // pred_fallthru
        _
    $region6: #{attention_forward.5} parent=1 // loop_footer
      %s16 = sadd.s32 1, %s12
    $region7: #{attention_forward.5} parent=1 // loop_footer_branch
      %11 = sbr.rel target = $region3
    $region8: #{attention_forward.5} parent=1 // loop_exit
      _
    %344 = vsyncpa [#allocation4], 1
    %s345 = scalar_lea.sflag [#allocation4], 1
    %346 = vsyncpa %s345, 1

// kernel: attention_forward.4
$region0: #{attention_forward.4}
  #allocation0 [shape = 'u32[]', space=smem, size = 0x4, offset = 0x4, fixed_abs, tag = 'smem constant byte address 0x4 - core index']
  #allocation1 [shape = 'u32[72,128]{1,0:T(1,128)}', space=vmem, size = 0x9000, scoped, tag = 'internal scratch']
  #allocation2 [shape = 'f32[2,8,1]{2,1,0:T(8,128)}', space=vmem, size = 0x2000, scoped, tag = 'scratch operand']
  #allocation3 [shape = 'f32[2,8,1]{2,1,0:T(8,128)}', space=vmem, size = 0x2000, scoped, tag = 'scratch operand']
  #allocation4 [shape = 'f32[2,8,16]{2,1,0:T(8,128)}', space=vmem, size = 0x2000, scoped, tag = 'scratch operand']
  %s0 = inlined_call_operand.vmem [shape: f32[2,6,8,16], index: 0, kind: input, shape index: {}, may-alias: {0,1,2}]
  %s1 = inlined_call_operand.vmem [shape: f32[2,6,8,16], index: 1, kind: input, shape index: {}, may-alias: {0,1,2}]
  %s2 = inlined_call_operand.vmem [shape: f32[2,6,8,16], index: 2, kind: input, shape index: {}, may-alias: {0,1,2}]
  %s3 = inlined_call_operand.vmem [shape: f32[2,1,8], index: 3, kind: input, shape index: {}]
  %s4 = inlined_call_operand.vmem [shape: f32[2,2,8,16], index: 4, kind: output, shape index: {}]
  %s5 = sld [smem:[#allocation0]]
  $region57: #{attention_forward.4} parent=0
    _
  %s7 = ssub.s32 1, %s5
  %s8 = scalar_select 0, %s7, %s5
  loop: start=0, step=1, limit=4
  $region2: #{attention_forward.4} parent=0 // loop_pre_header
    _
  $region3: #{attention_forward.4} parent=0 // loop_header
    %s10 = sphi 0, %s14
    %p11 = scmp.ge.s32.totalorder %s10, 4
    %s17 = sphi 0, %s36
    %s18 = sphi 0, %s32
    %s19 = sphi 0, %s28
    %s20 = sphi 0, %s17
    %s21 = sphi 0, %s18
    %s22 = sphi 0, %s19
    %s23 = sphi 0, %s20
    %s24 = sphi 0, %s21
    %s25 = sphi 0, %s22
    %s41 = sphi 0, %s43
    %s44 = sphi 0, %s41
    %s45 = sphi 0, %s44
    %s61 = sphi 0, %s45
    %s69 = sphi 0, %s71
    %s72 = sphi 0, %s69
    %s73 = sphi 0, %s72
    %s89 = sphi 0, %s73
    %s97 = sphi 0, %s99
    %s100 = sphi 0, %s97
    %s101 = sphi 0, %s100
    %s117 = sphi 0, %s101
    %s125 = sphi 0, %s127
    %s128 = sphi 0, %s125
    %s129 = sphi 0, %s128
    %s145 = sphi 0, %s129
    %s153 = sphi 0, %s155
    %s156 = sphi 0, %s153
    %s157 = sphi 0, %s156
    %s173 = sphi 0, %s157
  $region4: #{attention_forward.4} parent=0 // loop_header_branch
    %13 = sbr.rel (%p11) target = $region8
  $region5: #{attention_forward.4} parent=0 // loop_body
    %s15 = ssub.s32 %s10, 1
    %s16 = ssub.s32 %s10, 2
    %s26 = sadd.s32 1, %s19
    %p27 = scmp.ge.s32.totalorder %s26, 1
    %s28 = scalar_select %p27, 0, %s26
    %s29 = sadd.s32 1, %s18
    %s30 = scalar_select %p27, %s29, %s18
    %p31 = scmp.ge.s32.totalorder %s30, 1
    %s32 = scalar_select %p31, 0, %s30
    %s33 = sadd.s32 1, %s17
    %s34 = scalar_select %p31, %s33, %s17
    %p35 = scmp.ge.s32.totalorder %s34, 2
    %s36 = scalar_select %p35, 0, %s34
    %s37 = ssub.s32 %s17, %s36
    %s38 = ssub.s32 %s18, %s32
    %s39 = sor.u32 %s37, %s38
    %p40 = scmp.eq.s32.totalorder %s39, 0
    %s42 = sadd.s32 %s41, 1
    %s43 = scalar_select %p40, %s41, %s42
    %p46 = pneg %p40
    %p47 = scmp.eq.s32.totalorder %s10, 1
    %p48 = por %p46, %p47
    %p49 = scmp.ne.s32.totalorder %s41, %s44
    %p50 = scmp.eq.s32.totalorder %s10, 0
    %p51 = por %p49, %p50
    %p52 = scmp.ne.s32.totalorder %s41, %s44
    %p53 = scmp.eq.s32.totalorder %s15, 1
    %p54 = por %p52, %p53
    %p55 = scmp.ne.s32.totalorder %s44, %s45
    %p56 = scmp.eq.s32.totalorder %s15, 0
    %p57 = por %p55, %p56
    %p58 = scmp.ne.s32.totalorder %s44, %s45
    %p59 = scmp.eq.s32.totalorder %s16, 1
    %p60 = por %p58, %p59
    %p62 = scmp.ne.s32.totalorder %s45, %s61
    %p63 = scmp.eq.s32.totalorder %s16, 0
    %p64 = por %p62, %p63
    %s65 = ssub.s32 %s17, %s36
    %s66 = ssub.s32 %s19, %s28
    %s67 = sor.u32 %s65, %s66
    %p68 = scmp.eq.s32.totalorder %s67, 0
    %s70 = sadd.s32 %s69, 1
    %s71 = scalar_select %p68, %s69, %s70
    %p74 = pneg %p68
    %p75 = scmp.eq.s32.totalorder %s10, 1
    %p76 = por %p74, %p75
    %p77 = scmp.ne.s32.totalorder %s69, %s72
    %p78 = scmp.eq.s32.totalorder %s10, 0
    %p79 = por %p77, %p78
    %p80 = scmp.ne.s32.totalorder %s69, %s72
    %p81 = scmp.eq.s32.totalorder %s15, 1
    %p82 = por %p80, %p81
    %p83 = scmp.ne.s32.totalorder %s72, %s73
    %p84 = scmp.eq.s32.totalorder %s15, 0
    %p85 = por %p83, %p84
    %p86 = scmp.ne.s32.totalorder %s72, %s73
    %p87 = scmp.eq.s32.totalorder %s16, 1
    %p88 = por %p86, %p87
    %p90 = scmp.ne.s32.totalorder %s73, %s89
    %p91 = scmp.eq.s32.totalorder %s16, 0
    %p92 = por %p90, %p91
    %s93 = ssub.s32 %s17, %s36
    %s94 = ssub.s32 %s19, %s28
    %s95 = sor.u32 %s93, %s94
    %p96 = scmp.eq.s32.totalorder %s95, 0
    %s98 = sadd.s32 %s97, 1
    %s99 = scalar_select %p96, %s97, %s98
    %p102 = pneg %p96
    %p103 = scmp.eq.s32.totalorder %s10, 1
    %p104 = por %p102, %p103
    %p105 = scmp.ne.s32.totalorder %s97, %s100
    %p106 = scmp.eq.s32.totalorder %s10, 0
    %p107 = por %p105, %p106
    %p108 = scmp.ne.s32.totalorder %s97, %s100
    %p109 = scmp.eq.s32.totalorder %s15, 1
    %p110 = por %p108, %p109
    %p111 = scmp.ne.s32.totalorder %s100, %s101
    %p112 = scmp.eq.s32.totalorder %s15, 0
    %p113 = por %p111, %p112
    %p114 = scmp.ne.s32.totalorder %s100, %s101
    %p115 = scmp.eq.s32.totalorder %s16, 1
    %p116 = por %p114, %p115
    %p118 = scmp.ne.s32.totalorder %s101, %s117
    %p119 = scmp.eq.s32.totalorder %s16, 0
    %p120 = por %p118, %p119
    %s121 = ssub.s32 %s17, %s36
    %s122 = ssub.s32 %s19, %s28
    %s123 = sor.u32 %s121, %s122
    %p124 = scmp.eq.s32.totalorder %s123, 0
    %s126 = sadd.s32 %s125, 1
    %s127 = scalar_select %p124, %s125, %s126
    %p130 = pneg %p124
    %p131 = scmp.eq.s32.totalorder %s10, 1
    %p132 = por %p130, %p131
    %p133 = scmp.ne.s32.totalorder %s125, %s128
    %p134 = scmp.eq.s32.totalorder %s10, 0
    %p135 = por %p133, %p134
    %p136 = scmp.ne.s32.totalorder %s125, %s128
    %p137 = scmp.eq.s32.totalorder %s15, 1
    %p138 = por %p136, %p137
    %p139 = scmp.ne.s32.totalorder %s128, %s129
    %p140 = scmp.eq.s32.totalorder %s15, 0
    %p141 = por %p139, %p140
    %p142 = scmp.ne.s32.totalorder %s128, %s129
    %p143 = scmp.eq.s32.totalorder %s16, 1
    %p144 = por %p142, %p143
    %p146 = scmp.ne.s32.totalorder %s129, %s145
    %p147 = scmp.eq.s32.totalorder %s16, 0
    %p148 = por %p146, %p147
    %s149 = ssub.s32 %s17, %s36
    %s150 = ssub.s32 %s18, %s32
    %s151 = sor.u32 %s149, %s150
    %p152 = scmp.eq.s32.totalorder %s151, 0
    %s154 = sadd.s32 %s153, 1
    %s155 = scalar_select %p152, %s153, %s154
    %p158 = pneg %p152
    %p159 = scmp.eq.s32.totalorder %s10, 1
    %p160 = por %p158, %p159
    %p161 = scmp.ne.s32.totalorder %s153, %s156
    %p162 = scmp.eq.s32.totalorder %s10, 0
    %p163 = por %p161, %p162
    %p164 = scmp.ne.s32.totalorder %s153, %s156
    %p165 = scmp.eq.s32.totalorder %s15, 1
    %p166 = por %p164, %p165
    %p167 = scmp.ne.s32.totalorder %s156, %s157
    %p168 = scmp.eq.s32.totalorder %s15, 0
    %p169 = por %p167, %p168
    %p170 = scmp.ne.s32.totalorder %s156, %s157
    %p171 = scmp.eq.s32.totalorder %s16, 1
    %p172 = por %p170, %p171
    %p174 = scmp.ne.s32.totalorder %s157, %s173
    %p175 = scmp.eq.s32.totalorder %s16, 0
    %p176 = por %p174, %p175
    %p177 = scmp.le.s32.totalorder 1, %s10
    %p178 = scmp.lt.s32.totalorder %s10, 3
    %p179 = pnand %p177, %p178
    %p180 = pneg %p179
    // Predicated region
    $region9: #{attention_forward.4} parent=5 // pred_check
      _
    $region10: #{attention_forward.4} parent=5 // pred_check_branch
      %182 = sbr.rel (%p179) target = $region12
    $region11: #{attention_forward.4} parent=5 // pred_region
      %s183 = ssub.s32 %s10, 1
    $region12: #{attention_forward.4} parent=5 // pred_fallthru
      _
    %p184 = scmp.lt.s32.totalorder %s10, 2
    // Predicated region
    $region13: #{attention_forward.4} parent=5 // pred_check
      %p185 = pneg %p184
    $region14: #{attention_forward.4} parent=5 // pred_check_branch
      %187 = sbr.rel (%p185) target = $region16
    $region15: #{attention_forward.4} parent=5 // pred_region
      // Predicated region
      $region17: #{attention_forward.4} parent=15 // pred_check
        %p188 = pneg %p51
      $region18: #{attention_forward.4} parent=15 // pred_check_branch
        %190 = sbr.rel (%p188) target = $region20
      $region19: #{attention_forward.4} parent=15 // pred_region
        %p191 = scmp.lt.s32.totalorder %s17, 1
        %s192 = scalar_select %p191, %s17, 1
        %p193 = scmp.lt.s32.totalorder %s18, 0
        %s194 = scalar_select %p193, %s18, 0
        %s195 = smul.addr %s192, 6
        %s196 = sadd.s32 %s194, %s195
        %s197 = smul.addr %s196, 8
        %s198 = scalar_lea.vmem %s0, %s197
      $region20: #{attention_forward.4} parent=15 // pred_fallthru
        _
      // Predicated region
      $region21: #{attention_forward.4} parent=15 // pred_check
        %p199 = pneg %p79
      $region22: #{attention_forward.4} parent=15 // pred_check_branch
        %201 = sbr.rel (%p199) target = $region24
      $region23: #{attention_forward.4} parent=15 // pred_region
        %p202 = scmp.lt.s32.totalorder %s17, 1
        %s203 = scalar_select %p202, %s17, 1
        %p204 = scmp.lt.s32.totalorder %s19, 0
        %s205 = scalar_select %p204, %s19, 0
        %s206 = sadd.s32 %s205, 2
        %s207 = smul.addr %s203, 6
        %s208 = sadd.s32 %s206, %s207
        %s209 = smul.addr %s208, 8
        %s210 = scalar_lea.vmem %s1, %s209
      $region24: #{attention_forward.4} parent=15 // pred_fallthru
        _
      // Predicated region
      $region25: #{attention_forward.4} parent=15 // pred_check
        %p211 = pneg %p107
      $region26: #{attention_forward.4} parent=15 // pred_check_branch
        %213 = sbr.rel (%p211) target = $region28
      $region27: #{attention_forward.4} parent=15 // pred_region
        %p214 = scmp.lt.s32.totalorder %s17, 1
        %s215 = scalar_select %p214, %s17, 1
        %p216 = scmp.lt.s32.totalorder %s19, 0
        %s217 = scalar_select %p216, %s19, 0
        %s218 = sadd.s32 %s217, 4
        %s219 = smul.addr %s215, 6
        %s220 = sadd.s32 %s218, %s219
        %s221 = smul.addr %s220, 8
        %s222 = scalar_lea.vmem %s2, %s221
      $region28: #{attention_forward.4} parent=15 // pred_fallthru
        _
      // Predicated region
      $region29: #{attention_forward.4} parent=15 // pred_check
        %p223 = pneg %p135
      $region30: #{attention_forward.4} parent=15 // pred_check_branch
        %225 = sbr.rel (%p223) target = $region32
      $region31: #{attention_forward.4} parent=15 // pred_region
        %p226 = scmp.lt.s32.totalorder %s17, 1
        %s227 = scalar_select %p226, %s17, 1
        %p228 = scmp.lt.s32.totalorder %s19, 0
        %s229 = scalar_select %p228, %s19, 0
        %s230 = sadd.s32 %s229, %s227
        %s231 = scalar_lea.vmem %s3, %s230
      $region32: #{attention_forward.4} parent=15 // pred_fallthru
        _
    $region16: #{attention_forward.4} parent=5 // pred_fallthru
      _
    %p232 = scmp.le.s32.totalorder 1, %s10
    %p233 = scmp.lt.s32.totalorder %s10, 3
    %p234 = pnand %p232, %p233
    %p235 = pneg %p234
    // Predicated region
    $region33: #{attention_forward.4} parent=5 // pred_check
      _
    $region34: #{attention_forward.4} parent=5 // pred_check_branch
      %237 = sbr.rel (%p234) target = $region36
    $region35: #{attention_forward.4} parent=5 // pred_region
      %s238 = ssub.s32 %s10, 1
      %p239 = scmp.lt.s32.totalorder %s20, 1
      %s240 = scalar_select %p239, %s20, 1
      %p241 = scmp.lt.s32.totalorder %s21, 0
      %s242 = scalar_select %p241, %s21, 0
      %s243 = smul.addr %s240, 6
      %s244 = sadd.s32 %s242, %s243
      %s245 = smul.addr %s244, 8
      %s246 = scalar_lea.vmem %s0, %s245
      %p247 = pneg %p57
      %p248 = pneg %p54
      %p249 = scmp.lt.s32.totalorder %s20, 1
      %s250 = scalar_select %p249, %s20, 1
      %p251 = scmp.lt.s32.totalorder %s22, 0
      %s252 = scalar_select %p251, %s22, 0
      %s253 = sadd.s32 %s252, 2
      %s254 = smul.addr %s250, 6
      %s255 = sadd.s32 %s253, %s254
      %s256 = smul.addr %s255, 8
      %s257 = scalar_lea.vmem %s1, %s256
      %p258 = pneg %p85
      %p259 = pneg %p82
      %p260 = scmp.lt.s32.totalorder %s20, 1
      %s261 = scalar_select %p260, %s20, 1
      %p262 = scmp.lt.s32.totalorder %s22, 0
      %s263 = scalar_select %p262, %s22, 0
      %s264 = sadd.s32 %s263, 4
      %s265 = smul.addr %s261, 6
      %s266 = sadd.s32 %s264, %s265
      %s267 = smul.addr %s266, 8
      %s268 = scalar_lea.vmem %s2, %s267
      %p269 = pneg %p113
      %p270 = pneg %p110
      %p271 = scmp.lt.s32.totalorder %s20, 1
      %s272 = scalar_select %p271, %s20, 1
      %p273 = scmp.lt.s32.totalorder %s22, 0
      %s274 = scalar_select %p273, %s22, 0
      %s275 = sadd.s32 %s274, %s272
      %s276 = scalar_lea.vmem %s3, %s275
      %p277 = pneg %p141
      %p278 = pneg %p138
      %p279 = pneg %p169
      %p280 = pneg %p166
      %p281 = scmp.lt.s32.totalorder %s20, 1
      %s282 = scalar_select %p281, %s20, 1
      %p283 = scmp.lt.s32.totalorder %s21, 0
      %s284 = scalar_select %p283, %s21, 0
      %s285 = smul.addr %s282, 2
      %s286 = sadd.s32 %s284, %s285
      %s287 = smul.addr %s286, 8
      %s288 = scalar_lea.vmem %s4, %s287
      %p289 = scmp.lt.s32.totalorder %s20, 1
      %s290 = scalar_select %p289, %s20, 1
      %p291 = scmp.lt.s32.totalorder %s21, 0
      %s292 = scalar_select %p291, %s21, 0
      %s293 = smul.addr %s290, 6
      %s294 = sadd.s32 %s292, %s293
      %s295 = smul.addr %s294, 8
      %s296 = scalar_lea.vmem %s0, %s295
      %p297 = scmp.lt.s32.totalorder %s20, 1
      %s298 = scalar_select %p297, %s20, 1
      %p299 = scmp.lt.s32.totalorder %s22, 0
      %s300 = scalar_select %p299, %s22, 0
      %s301 = sadd.s32 %s300, 2
      %s302 = smul.addr %s298, 6
      %s303 = sadd.s32 %s301, %s302
      %s304 = smul.addr %s303, 8
      %s305 = scalar_lea.vmem %s1, %s304
      %p306 = scmp.lt.s32.totalorder %s20, 1
      %s307 = scalar_select %p306, %s20, 1
      %p308 = scmp.lt.s32.totalorder %s22, 0
      %s309 = scalar_select %p308, %s22, 0
      %s310 = sadd.s32 %s309, 4
      %s311 = smul.addr %s307, 6
      %s312 = sadd.s32 %s310, %s311
      %s313 = smul.addr %s312, 8
      %s314 = scalar_lea.vmem %s2, %s313
      %p315 = scmp.lt.s32.totalorder %s20, 1
      %s316 = scalar_select %p315, %s20, 1
      %p317 = scmp.lt.s32.totalorder %s22, 0
      %s318 = scalar_select %p317, %s22, 0
      %s319 = sadd.s32 %s318, %s316
      %s320 = scalar_lea.vmem %s3, %s319
      %p321 = scmp.lt.s32.totalorder %s20, 1
      %s322 = scalar_select %p321, %s20, 1
      %p323 = scmp.lt.s32.totalorder %s21, 0
      %s324 = scalar_select %p323, %s21, 0
      %s325 = smul.addr %s322, 2
      %s326 = sadd.s32 %s324, %s325
      %s327 = smul.addr %s326, 8
      %s328 = scalar_lea.vmem %s4, %s327
      %p329 = scmp.eq.s32.totalorder %s22, 0
      // Predicated region
      $region37: #{attention_forward.4} parent=35 // pred_check
        %p330 = pneg %p329
      $region38: #{attention_forward.4} parent=35 // pred_check_branch
        %332 = sbr.rel (%p330) target = $region40
      $region39: #{attention_forward.4} parent=35 // pred_region
        %vm333 = vcmask 7168
        %334 = vst.msk [vmem:[#allocation2] sm:$0xff] %vm333, -inf
        %335 = vst.msk [vmem:[#allocation2 + $0x8] sm:$0xff] %vm333, -inf
        %336 = vst.msk [vmem:[#allocation3] sm:$0xff] %vm333, 0.0
        %337 = vst.msk [vmem:[#allocation3 + $0x8] sm:$0xff] %vm333, 0.0
        %vm338 = vcmask 130048
        %339 = vst.msk [vmem:[#allocation4] sm:$0xff] %vm338, 0.0
        %340 = vst.msk [vmem:[#allocation4 + $0x8] sm:$0xff] %vm338, 0.0
      $region40: #{attention_forward.4} parent=35 // pred_fallthru
        _
      %v341 = vld [vmem:[%s296] sm:$0xff]
      %v342 = vld [vmem:[%s296 + $0x8] sm:$0xff]
      %v343 = vld [vmem:[%s305] sm:$0xff]
      %v344 = vld [vmem:[%s305 + $0x8] sm:$0xff]
      %v345 = vld [vmem:[%s314] sm:$0xff]
      %v346 = vld [vmem:[%s314 + $0x8] sm:$0xff]
      %v347 = vld [vmem:[%s320] sm:$0x1]
      %v349 = vperm.slane %v347, 0
      %vm351 = vcmask 130048
      %v353 = vsel %vm351, %v341, 0
      %v356 = vsel %vm351, %v343, 0
      %358 = vmatpush.xpose.msra.mxu0 0.0
      %359 = vmatpush.xpose.msra.mxu0 0.0
      %360 = vmatpush.xpose.msra.mxu0 0.0
      %361 = vmatpush.xpose.msra.mxu0 0.0
      %362 = vmatpush.xpose.msra.mxu0 0.0
      %363 = vmatpush.xpose.msra.mxu0 0.0
      %364 = vmatpush.xpose.msra.mxu0 0.0
      %365 = vmatpush.xpose.msra.mxu0 0.0
      %366 = vmatpush.xpose.msra.mxu0 0.0
      %367 = vmatpush.xpose.msra.mxu0 0.0
      %368 = vmatpush.xpose.msra.mxu0 0.0
      %369 = vmatpush.xpose.msra.mxu0 0.0
      %370 = vmatpush.xpose.msra.mxu0 0.0
      %371 = vmatpush.xpose.msra.mxu0 0.0
      %372 = vmatpush.xpose.msra.mxu0 0.0
      %373 = vmatpush.xpose.msra.mxu0 %v356
      %374 = vmatmul.f32.gmra.mxu0 %v353
      %v375 = vpop.f32.mrf.mxu0
      %v376 = vadd.f32 %v349, %v375
      %377 = vdwg.mxu0
      %v379 = vsel %vm351, %v342, 0
      %v382 = vsel %vm351, %v344, 0
      %384 = vmatpush.xpose.msra.mxu0 0.0
      %385 = vmatpush.xpose.msra.mxu0 0.0
      %386 = vmatpush.xpose.msra.mxu0 0.0
      %387 = vmatpush.xpose.msra.mxu0 0.0
      %388 = vmatpush.xpose.msra.mxu0 0.0
      %389 = vmatpush.xpose.msra.mxu0 0.0
      %390 = vmatpush.xpose.msra.mxu0 0.0
      %391 = vmatpush.xpose.msra.mxu0 0.0
      %392 = vmatpush.xpose.msra.mxu0 0.0
      %393 = vmatpush.xpose.msra.mxu0 0.0
      %394 = vmatpush.xpose.msra.mxu0 0.0
      %395 = vmatpush.xpose.msra.mxu0 0.0
      %396 = vmatpush.xpose.msra.mxu0 0.0
      %397 = vmatpush.xpose.msra.mxu0 0.0
      %398 = vmatpush.xpose.msra.mxu0 0.0
      %399 = vmatpush.xpose.msra.mxu0 %v382
      %400 = vmatmul.f32.gmra.mxu0 %v379
      %v401 = vpop.f32.mrf.mxu0
      %v402 = vadd.f32 %v349, %v401
      %403 = vdwg.mxu0
      %v404 = vld [vmem:[#allocation2] sm:$0xff]
      %v405 = vld [vmem:[#allocation2 + $0x8] sm:$0xff]
      %vm406 = vcmask 64512
      %v407 = vsel %vm406, %v376, -inf
      %408 = vmax.xlane.f32.xlu0 %v407
      %v409 = vpop.xlane.xlu0 %408
      %v410 = vsel %vm406, %v402, -inf
      %411 = vmax.xlane.f32.xlu0 %v410
      %v412 = vpop.xlane.xlu0 %411
      %v413 = vmax.f32 %v404, %v409
      %v414 = vmax.f32 %v405, %v412
      %v415 = vsub.f32 %v404, %v413
      %v416 = vsub.f32 %v405, %v414
      %v417 = vmul.f32 %v415, 1.442695
      %v418 = vpow.pop %v417
      %v419 = vmul.f32 %v416, 1.442695
      %v420 = vpow.pop %v419
      %422 = vset.pattern.permute.xlu0 0
      %423 = vperm.xlu0 %422, %v413
      %v424 = vpop.permute.xlu0 %423
      %427 = vset.pattern.permute.xlu0 0
      %428 = vperm.xlu0 %427, %v414
      %v429 = vpop.permute.xlu0 %428
      %v431 = vsub.f32 %v376, %v424
      %v432 = vsub.f32 %v402, %v429
      %v433 = vmul.f32 %v431, 1.442695
      %v434 = vpow.pop %v433
      %v435 = vmul.f32 %v432, 1.442695
      %v436 = vpow.pop %v435
      %v437 = vld [vmem:[#allocation3] sm:$0xff]
      %v438 = vld [vmem:[#allocation3 + $0x8] sm:$0xff]
      %v439 = vmul.f32 %v418, %v437
      %v440 = vmul.f32 %v420, %v438
      %v441 = vsel %vm406, %v434, 0.0
      %442 = vadd.xlane.f32.xlu0 %v441
      %v443 = vpop.xlane.xlu0 %442
      %v444 = vsel %vm406, %v436, 0.0
      %445 = vadd.xlane.f32.xlu0 %v444
      %v446 = vpop.xlane.xlu0 %445
      %v447 = vadd.f32 %v439, %v443
      %v448 = vadd.f32 %v440, %v446
      %vm449 = vcmask 7168
      %450 = vst.msk [vmem:[#allocation3] sm:$0xff] %vm449, %v447
      %451 = vst.msk [vmem:[#allocation3 + $0x8] sm:$0xff] %vm449, %v448
      %v452 = vld [vmem:[#allocation4] sm:$0xff]
      %v453 = vld [vmem:[#allocation4 + $0x8] sm:$0xff]
      %455 = vset.pattern.permute.xlu0 0
      %456 = vperm.xlu0 %455, %v418
      %v457 = vpop.permute.xlu0 %456
      %460 = vset.pattern.permute.xlu0 0
      %461 = vperm.xlu0 %460, %v420
      %v462 = vpop.permute.xlu0 %461
      %v464 = vmul.f32 %v457, %v452
      %v465 = vmul.f32 %v462, %v453
      %v467 = vsel %vm406, %v434, 0
      %469 = vmatpush.msra.mxu0 0.0
      %470 = vmatpush.msra.mxu0 0.0
      %471 = vmatpush.msra.mxu0 0.0
      %472 = vmatpush.msra.mxu0 0.0
      %473 = vmatpush.msra.mxu0 0.0
      %474 = vmatpush.msra.mxu0 0.0
      %475 = vmatpush.msra.mxu0 0.0
      %476 = vmatpush.msra.mxu0 0.0
      %477 = vmatpush.msra.mxu0 0.0
      %478 = vmatpush.msra.mxu0 0.0
      %479 = vmatpush.msra.mxu0 0.0
      %480 = vmatpush.msra.mxu0 0.0
      %481 = vmatpush.msra.mxu0 0.0
      %482 = vmatpush.msra.mxu0 0.0
      %483 = vmatpush.msra.mxu0 0.0
      %484 = vmatpush.msra.mxu0 %v345
      %485 = vmatmul.f32.gmra.mxu0 %v467
      %v486 = vpop.f32.mrf.mxu0
      %v487 = vadd.f32 0.0, %v486
      %488 = vdwg.mxu0
      %v490 = vsel %vm406, %v436, 0
      %492 = vmatpush.msra.mxu0 0.0
      %493 = vmatpush.msra.mxu0 0.0
      %494 = vmatpush.msra.mxu0 0.0
      %495 = vmatpush.msra.mxu0 0.0
      %496 = vmatpush.msra.mxu0 0.0
      %497 = vmatpush.msra.mxu0 0.0
      %498 = vmatpush.msra.mxu0 0.0
      %499 = vmatpush.msra.mxu0 0.0
      %500 = vmatpush.msra.mxu0 0.0
      %501 = vmatpush.msra.mxu0 0.0
      %502 = vmatpush.msra.mxu0 0.0
      %503 = vmatpush.msra.mxu0 0.0
      %504 = vmatpush.msra.mxu0 0.0
      %505 = vmatpush.msra.mxu0 0.0
      %506 = vmatpush.msra.mxu0 0.0
      %507 = vmatpush.msra.mxu0 %v346
      %508 = vmatmul.f32.gmra.mxu0 %v490
      %v509 = vpop.f32.mrf.mxu0
      %v510 = vadd.f32 0.0, %v509
      %511 = vdwg.mxu0
      %v512 = vadd.f32 %v464, %v487
      %v513 = vadd.f32 %v465, %v510
      %514 = vst.msk [vmem:[#allocation4] sm:$0xff] %vm351, %v512
      %515 = vst.msk [vmem:[#allocation4 + $0x8] sm:$0xff] %vm351, %v513
      %516 = vst.msk [vmem:[#allocation2] sm:$0xff] %vm449, %v413
      %517 = vst.msk [vmem:[#allocation2 + $0x8] sm:$0xff] %vm449, %v414
      // Predicated region
      $region41: #{attention_forward.4} parent=35 // pred_check
        %p518 = pneg %p329
      $region42: #{attention_forward.4} parent=35 // pred_check_branch
        %520 = sbr.rel (%p518) target = $region44
      $region43: #{attention_forward.4} parent=35 // pred_region
        %v521 = vld [vmem:[#allocation3] sm:$0xff]
        %v522 = vld [vmem:[#allocation3 + $0x8] sm:$0xff]
        %v523 = vrcp.pop %v521
        %v524 = vrcp.pop %v522
        %v525 = vmul.f32 %v521, %v523
        %v526 = vmul.f32 %v522, %v524
        %v527 = vsub.f32 2.0, %v525
        %v528 = vsub.f32 2.0, %v526
        %v529 = vmul.f32 %v523, %v527
        %v530 = vmul.f32 %v524, %v528
        %v531 = vld [vmem:[#allocation4] sm:$0xff]
        %v532 = vld [vmem:[#allocation4 + $0x8] sm:$0xff]
        %534 = vset.pattern.permute.xlu0 0
        %535 = vperm.xlu0 %534, %v529
        %v536 = vpop.permute.xlu0 %535
        %539 = vset.pattern.permute.xlu0 0
        %540 = vperm.xlu0 %539, %v530
        %v541 = vpop.permute.xlu0 %540
        %v543 = vmul.f32 %v531, %v536
        %v544 = vmul.f32 %v532, %v541
        %545 = vst.msk [vmem:[%s328] sm:$0xff] %vm351, %v543
        %546 = vst.msk [vmem:[%s328 + $0x8] sm:$0xff] %vm351, %v544
      $region44: #{attention_forward.4} parent=35 // pred_fallthru
        _
      %p547 = scmp.lt.s32.totalorder %s20, 1
      %s548 = scalar_select %p547, %s20, 1
      %p549 = scmp.lt.s32.totalorder %s21, 0
      %s550 = scalar_select %p549, %s21, 0
      %s551 = smul.addr %s548, 2
      %s552 = sadd.s32 %s550, %s551
      %s553 = smul.addr %s552, 8
      %s554 = scalar_lea.vmem %s4, %s553
      // Predicated region
      $region45: #{attention_forward.4} parent=35 // pred_check
        %p555 = pneg %p166
      $region46: #{attention_forward.4} parent=35 // pred_check_branch
        %557 = sbr.rel (%p555) target = $region48
      $region47: #{attention_forward.4} parent=35 // pred_region
        _
      $region48: #{attention_forward.4} parent=35 // pred_fallthru
        _
    $region36: #{attention_forward.4} parent=5 // pred_fallthru
      _
    %p558 = scmp.le.s32.totalorder 2, %s10
    // Predicated region
    $region49: #{attention_forward.4} parent=5 // pred_check
      %p559 = pneg %p558
    $region50: #{attention_forward.4} parent=5 // pred_check_branch
      %561 = sbr.rel (%p559) target = $region52
    $region51: #{attention_forward.4} parent=5 // pred_region
      %s562 = ssub.s32 %s10, 2
      // Predicated region
      $region53: #{attention_forward.4} parent=51 // pred_check
        %p563 = pneg %p172
      $region54: #{attention_forward.4} parent=51 // pred_check_branch
        %565 = sbr.rel (%p563) target = $region56
      $region55: #{attention_forward.4} parent=51 // pred_region
        %p566 = scmp.lt.s32.totalorder %s23, 1
        %s567 = scalar_select %p566, %s23, 1
        %p568 = scmp.lt.s32.totalorder %s24, 0
        %s569 = scalar_select %p568, %s24, 0
        %s570 = smul.addr %s567, 2
        %s571 = sadd.s32 %s569, %s570
        %s572 = smul.addr %s571, 8
        %s573 = scalar_lea.vmem %s4, %s572
      $region56: #{attention_forward.4} parent=51 // pred_fallthru
        _
    $region52: #{attention_forward.4} parent=5 // pred_fallthru
      _
  $region6: #{attention_forward.4} parent=0 // loop_footer
    %s14 = sadd.s32 1, %s10
  $region7: #{attention_forward.4} parent=0 // loop_footer_branch
    %9 = sbr.rel target = $region3
  $region8: #{attention_forward.4} parent=0 // loop_exit
    _

</llo_original>
